<compile_context>
chip_gen: v5e
topology: v5e:2x2
jax: 0.10.0
libtpu: 0.0.40
codegen_flags: <defaults>
</compile_context>

<pallas_src>
import math
import functools

import jax
import jax.numpy as jnp
from jax import lax
from jax.experimental import pallas as pl
from jax.experimental.pallas import tpu as pltpu


# --------------------------------------------------------------------------------------
# Kernel
# --------------------------------------------------------------------------------------
def _mha_kernel(x_ref, bias_ref, wqkv_ref, bqkv_ref, wproj_ref, bproj_ref,
                o_ref, qkv_scr, attn_scr, *, b_tile, n_ctx, heads, attn_ch, width):
    # x_ref:     (b_tile, n_ctx, width)  bf16
    # bias_ref:  (b_tile, 1, n_ctx)      f32 additive key-padding bias (0 or -1e30)
    # wqkv_ref:  (width, 3*width)        bf16, columns permuted to [Q_all|K_all|V_all],
    #                                    per-head chunks contiguous, Q columns pre-scaled
    # bqkv_ref:  (1, 3*width)            f32 (same permutation / scaling)
    # wproj_ref: (width, width)          bf16
    # bproj_ref: (1, width)              f32
    # o_ref:     (b_tile, n_ctx, width)
    # qkv_scr:   (b_tile*n_ctx, 3*width) bf16 VMEM scratch (QKV projection result)
    # attn_scr:  (b_tile*n_ctx, width)   bf16 VMEM scratch (per-head PV outputs, no concat)
    rows = b_tile * n_ctx

    # ---- QKV projection: one big GEMM, M = rows, K = width, N = 3*width (full MXU lanes).
    x2d = x_ref[...].reshape(rows, width)                                    # bf16
    qkv_scr[...] = (jnp.dot(x2d, wqkv_ref[...],
                            preferred_element_type=jnp.float32)
                    + bqkv_ref[0]).astype(jnp.bfloat16)

    # ---- Attention per (batch element, head); all operands round-trip through bf16 scratch
    #      refs, never a large live value.
    def batch_body(b, carry):
        r0 = pl.multiple_of(b * n_ctx, n_ctx)
        rs = pl.ds(r0, n_ctx)
        bias_row = bias_ref[b]                                               # (1, n_ctx) f32
        for h in range(heads):                                               # static lane offsets
            c0 = h * attn_ch
            q = qkv_scr[rs, c0:c0 + attn_ch]                                 # pre-scaled, bf16
            k = qkv_scr[rs, width + c0:width + c0 + attn_ch]
            v = qkv_scr[rs, 2 * width + c0:2 * width + c0 + attn_ch]

            # scores = q @ k^T, contracting the channel dim of both (no materialized transpose).
            s = lax.dot_general(q, k, (((1,), (1,)), ((), ())),
                                preferred_element_type=jnp.float32)          # (n_ctx, n_ctx) f32
            s = s + bias_row                         # implicit sublane broadcast of (1, n_ctx)
            s = s - jnp.max(s, axis=-1, keepdims=True)
            e = jnp.exp(s)
            p = e * pl.reciprocal(jnp.sum(e, axis=-1, keepdims=True), approx=True)

            attn_scr[rs, c0:c0 + attn_ch] = jnp.dot(
                p.astype(jnp.bfloat16), v,
                preferred_element_type=jnp.float32).astype(jnp.bfloat16)
        return carry

    lax.fori_loop(0, b_tile, batch_body, 0, unroll=(b_tile * heads <= 16))

    # ---- Output projection: one big GEMM, M = rows, K = width, N = width.
    #      attn_scr is kept channel-contiguous (head blocks side by side on the lane dim),
    #      matching torch's head concat, so wproj needs no row permutation and the GEMM
    #      needs no relayout of the scratch.
    y = jnp.dot(attn_scr[...], wproj_ref[...],
                preferred_element_type=jnp.float32) + bproj_ref[0]
    o_ref[...] = y.reshape(b_tile, n_ctx, width).astype(o_ref.dtype)


# --------------------------------------------------------------------------------------
# Generation-aware tiling helpers
# --------------------------------------------------------------------------------------
def _device_kind():
    try:
        return jax.devices()[0].device_kind.lower()
    except Exception:
        return ""


def _pick_b_tile(bs, n_ctx, kind):
    # v5e MXU is 4x128x128 -> M=128 already saturates it; v6e/v7x are 256-wide.
    target_rows = 128 if "v5" in kind else 256
    # v7x has 2 TensorCores/chip: keep >= 2 grid steps so the 'parallel' batch axis
    # can be sharded (and input/output DMA actually pipelines).
    min_steps = 2 if ("v7" in kind and bs >= 2) else 1
    bt = max(1, min(bs, target_rows // max(n_ctx, 1)))
    bt = min(bt, max(1, bs // min_steps))
    while bs % bt != 0:
        bt -= 1
    return bt


def _vmem_need_bytes(b_tile, n_ctx, width, single_buffer_weights=True):
    """Approximate per-grid-step VMEM footprint of this kernel."""
    rows = b_tile * n_ctx
    need = 2 * rows * width * 2            # x block, bf16, double buffered
    need += 2 * rows * width * 4           # out block, f32, double buffered
    need += 2 * b_tile * 8 * 128 * 4       # mask-bias block (tile-padded), double buffered
    wbuf = 1 if single_buffer_weights else 2
    need += wbuf * (width * 3 * width * 2 + 3 * width * 4 + width * width * 2 + width * 4)
    need += rows * 3 * width * 2 + rows * width * 2   # bf16 scratches
    return need


# --------------------------------------------------------------------------------------
# Wrapper
# --------------------------------------------------------------------------------------
def prepare_params(params):
    """One-time weight prep (hoisted out of the per-call path)."""
    heads = params["heads"]
    width = params["wproj"].shape[0]
    attn_ch = width // heads

    # Permute QKV output columns from torch's per-head [q_h|k_h|v_h] interleave to a
    # contiguous [Q_all | K_all | V_all] layout (per-head chunks back to back).
    head_idx = jnp.arange(heads)[:, None] * (3 * attn_ch) + jnp.arange(attn_ch)[None, :]
    q_cols = head_idx.reshape(-1)
    perm = jnp.concatenate([q_cols, q_cols + attn_ch, q_cols + 2 * attn_ch])

    # Fold the full softmax scale (attn_ch**-0.5) into the Q columns of the projection.
    scale = 1.0 / math.sqrt(attn_ch)
    col_scale = jnp.concatenate([jnp.full((width,), scale, jnp.float32),
                                 jnp.ones((2 * width,), jnp.float32)])

    wqkv_bf = (params["wqkv"].T[:, perm] * col_scale[None, :]).astype(jnp.bfloat16)
    bqkv = (params["bqkv"][perm] * col_scale)[None, :].astype(jnp.float32)
    wproj_bf = params["wproj"].T.astype(jnp.bfloat16)
    bproj = params["bproj"][None, :].astype(jnp.float32)

    return {"heads": heads, "width": width, "attn_ch": attn_ch,
            "wqkv": wqkv_bf, "bqkv": bqkv, "wproj": wproj_bf, "bproj": bproj}


def multihead_attention(x, prepared, key_padding_mask=None, b_tile=None):
    """x: (bs, n_ctx, width) f32; key_padding_mask: optional (bs, n_ctx) bool (True = masked key)."""
    bs, n_ctx, width = x.shape
    heads = prepared["heads"]
    attn_ch = prepared["attn_ch"]
    assert prepared["width"] == width

    kind = _device_kind()
    if b_tile is None:
        b_tile = _pick_b_tile(bs, n_ctx, kind)

    # Prefer shrinking b_tile over blowing past the generation's comfortable VMEM budget
    # (v7x only has 64 MiB physical VMEM).
    vmem_cap = (48 << 20) if "v7" in kind else (100 << 20)
    while b_tile > 1 and _vmem_need_bytes(b_tile, n_ctx, width) > vmem_cap:
        nbt = b_tile - 1
        while bs % nbt != 0:
            nbt -= 1
        b_tile = nbt
    need = _vmem_need_bytes(b_tile, n_ctx, width)
    vmem_limit = int(min(vmem_cap, max(16 << 20, int(need * 1.3) + (2 << 20))))

    rows = b_tile * n_ctx
    x_bf = x.astype(jnp.bfloat16)

    # Additive key-padding bias computed once (no per-head where/broadcast; fully-masked
    # rows give uniform attention instead of NaN -- documented divergence from -inf fill).
    if key_padding_mask is None:
        bias = jnp.zeros((bs, 1, n_ctx), jnp.float32)
    else:
        bias = jnp.where(key_padding_mask, -1e30, 0.0).astype(jnp.float32).reshape(bs, 1, n_ctx)

    kernel = functools.partial(_mha_kernel, b_tile=b_tile, n_ctx=n_ctx,
                               heads=heads, attn_ch=attn_ch, width=width)

    def call(single_buffer_weights):
        # Constant-index weight/bias blocks: request single buffering (they never change
        # across grid steps, so double buffering only wastes VMEM).
        wkw = dict(pipeline_mode=pl.Buffered(1)) if single_buffer_weights else {}
        grid_spec = pltpu.PrefetchScalarGridSpec(
            num_scalar_prefetch=0,
            grid=(bs // b_tile,),
            in_specs=[
                pl.BlockSpec((b_tile, n_ctx, width), lambda i: (i, 0, 0)),       # x (bf16)
                pl.BlockSpec((b_tile, 1, n_ctx), lambda i: (i, 0, 0)),            # mask bias
                pl.BlockSpec((width, 3 * width), lambda i: (0, 0), **wkw),        # Wqkv^T (bf16)
                pl.BlockSpec((1, 3 * width), lambda i: (0, 0), **wkw),            # bqkv
                pl.BlockSpec((width, width), lambda i: (0, 0), **wkw),            # Wproj^T (bf16)
                pl.BlockSpec((1, width), lambda i: (0, 0), **wkw),                # bproj
            ],
            out_specs=pl.BlockSpec((b_tile, n_ctx, width), lambda i: (i, 0, 0)),
            scratch_shapes=[
                pltpu.VMEM((rows, 3 * width), jnp.bfloat16),   # QKV projection result
                pltpu.VMEM((rows, width), jnp.bfloat16),       # per-head attention outputs
            ],
        )
        return pl.pallas_call(
            kernel,
            out_shape=jax.ShapeDtypeStruct((bs, n_ctx, width), x.dtype),
            grid_spec=grid_spec,
            compiler_params=pltpu.CompilerParams(
                dimension_semantics=("parallel",),
                vmem_limit_bytes=vmem_limit,
            ),
        )(x_bf, bias, prepared["wqkv"], prepared["bqkv"], prepared["wproj"], prepared["bproj"])

    try:
        return call(True)
    except Exception:
        # pl.Buffered(1) not accepted by this jax/Mosaic version -> default double buffering.
        return call(False)


# --------------------------------------------------------------------------------------
# Pure-JAX reference (mirror of the PyTorch forward) + test
# --------------------------------------------------------------------------------------
def _reference(x, params, key_padding_mask=None):
    bs, n_ctx, width = x.shape
    heads = params["heads"]
    attn_ch = width // heads
    qkv = x @ params["wqkv"].T + params["bqkv"]                 # (bs, n_ctx, 3*width)
    qkv = qkv.reshape(bs, n_ctx, heads, 3 * attn_ch)
    q, k, v = jnp.split(qkv, 3, axis=-1)
    scale = 1.0 / math.sqrt(math.sqrt(attn_ch))
    w = jnp.einsum("bthc,bshc->bhts", q * scale, k * scale)
    if key_padding_mask is not None:
        w = jnp.where(key_padding_mask[:, None, None, :], -jnp.inf, w)
    w = jax.nn.softmax(w.astype(jnp.float32), axis=-1).astype(w.dtype)
    out = jnp.einsum("bhts,bshc->bthc", w, v).reshape(bs, n_ctx, width)
    return out @ params["wproj"].T + params["bproj"]


def init_params(key, width, heads):
    k1, k2, k3, k4 = jax.random.split(key, 4)
    bound = 1.0 / math.sqrt(width)
    return {
        "heads": heads,
        # nn.Linear(width, 3*width): weight (3*width, width), bias (3*width,)
        "wqkv": jax.random.uniform(k1, (3 * width, width), jnp.float32, -bound, bound),
        "bqkv": jax.random.uniform(k2, (3 * width,), jnp.float32, -bound, bound),
        # nn.Linear(width, width)
        "wproj": jax.random.uniform(k3, (width, width), jnp.float32, -bound, bound),
        "bproj": jax.random.uniform(k4, (width,), jnp.float32, -bound, bound),
    }


if __name__ == "__main__":
    bs, n_ctx, width, heads = 2, 8, 32, 4

    key = jax.random.PRNGKey(0)
    kx, kp = jax.random.split(key, 2)

    x = jax.random.normal(kx, (bs, n_ctx, width), dtype=jnp.float32)
    # mask the last two keys of batch element 1 (True == padded)
    key_padding_mask = jnp.zeros((bs, n_ctx), dtype=bool).at[1, -2:].set(True)
    params = init_params(kp, width, heads)

    prepared = prepare_params(params)            # one-time weight prep (hoisted out of fwd)
    out = multihead_attention(x, prepared, key_padding_mask)
    out = jax.block_until_ready(out)

    ref = _reference(x, params, key_padding_mask)
    assert out.shape == (bs, n_ctx, width)
    # bf16 matmul operands (+ approx reciprocal) vs. the f32 reference -> loosened tolerance.
    assert jnp.allclose(out, ref, atol=5e-2, rtol=5e-2), "mismatch vs JAX reference"

    print("KERNEL_OK")
</pallas_src>

<mosaic_0001>
module attributes {stable_mosaic.version = 11 : i64} {
  func.func @_mha_kernel(%arg0: i32, %arg1: memref<2x8x32xbf16, #tpu.memory_space<vmem>>, %arg2: memref<2x1x8xf32, #tpu.memory_space<vmem>>, %arg3: memref<32x96xbf16, #tpu.memory_space<vmem>>, %arg4: memref<1x96xf32, #tpu.memory_space<vmem>>, %arg5: memref<32x32xbf16, #tpu.memory_space<vmem>>, %arg6: memref<1x32xf32, #tpu.memory_space<vmem>>, %arg7: memref<2x8x32xf32, #tpu.memory_space<vmem>>, %arg8: memref<16x96xbf16, #tpu.memory_space<vmem>>, %arg9: memref<16x32xbf16, #tpu.memory_space<vmem>>) attributes {dimension_semantics = [#tpu.dimension_semantics<parallel>], iteration_bounds = array<i64: 1>, scalar_prefetch = 0 : i64, scratch_operands = 2 : i64, tpu.core_type = #tpu.core_type<tc>, window_params = [{transform_indices = @transform_0, window_bounds = array<i64: 2, 8, 32>}, {transform_indices = @transform_1, window_bounds = array<i64: 2, 1, 8>}, {pipeline_mode = #tpu.pipeline_mode<synchronous>, transform_indices = @transform_2, window_bounds = array<i64: 32, 96>}, {pipeline_mode = #tpu.pipeline_mode<synchronous>, transform_indices = @transform_3, window_bounds = array<i64: 1, 96>}, {pipeline_mode = #tpu.pipeline_mode<synchronous>, transform_indices = @transform_4, window_bounds = array<i64: 32, 32>}, {pipeline_mode = #tpu.pipeline_mode<synchronous>, transform_indices = @transform_5, window_bounds = array<i64: 1, 32>}, {transform_indices = @transform_6, window_bounds = array<i64: 2, 8, 32>}]} {
    %c0 = arith.constant 0 : index
    %c0_0 = arith.constant 0 : index
    %c0_1 = arith.constant 0 : index
    %0 = vector.load %arg1[%c0, %c0_0, %c0_1] : memref<2x8x32xbf16, #tpu.memory_space<vmem>>, vector<2x8x32xbf16>
    %1 = vector.shape_cast %0 : vector<2x8x32xbf16> to vector<16x32xbf16>
    %c0_2 = arith.constant 0 : index
    %c0_3 = arith.constant 0 : index
    %2 = vector.load %arg3[%c0_2, %c0_3] : memref<32x96xbf16, #tpu.memory_space<vmem>>, vector<32x96xbf16>
    %cst = arith.constant dense<0.000000e+00> : vector<16x96xf32>
    %3 = tpu.matmul %1, %2, %cst {dimension_numbers = #tpu.dot_dimension_numbers<[1], [0], [0], [1], [0, 0, 1, 1], [], []>} : vector<16x32xbf16>, vector<32x96xbf16>, vector<16x96xf32> -> vector<16x96xf32>
    %c0_4 = arith.constant 0 : index
    %c0_5 = arith.constant 0 : index
    %4 = vector.load %arg4[%c0_4, %c0_5] : memref<1x96xf32, #tpu.memory_space<vmem>>, vector<1x96xf32>
    %5 = vector.shape_cast %4 : vector<1x96xf32> to vector<96xf32>
    %6 = vector.shape_cast %5 : vector<96xf32> to vector<1x96xf32>
    %7 = vector.broadcast %6 : vector<1x96xf32> to vector<16x96xf32>
    %8 = arith.addf %3, %7 : vector<16x96xf32>
    %9 = arith.truncf %8 : vector<16x96xf32> to vector<16x96xbf16>
    %c0_6 = arith.constant 0 : index
    %c0_7 = arith.constant 0 : index
    %10 = vector.load %arg8[%c0_6, %c0_7] : memref<16x96xbf16, #tpu.memory_space<vmem>>, vector<16x96xbf16>
    tpu.vector_store %arg8[%c0_6, %c0_7], %9 {strides = array<i32>} : memref<16x96xbf16, #tpu.memory_space<vmem>>, vector<16x96xbf16>,
    %c0_i32 = arith.constant 0 : i32
    %c8_i32 = arith.constant 8 : i32
    %11 = arith.muli %c0_i32, %c8_i32 : i32
    %12 = tpu.assume_multiple %11, 8 : i32
    %13 = arith.index_cast %c0_i32 : i32 to index
    %c0_8 = arith.constant 0 : index
    %c0_9 = arith.constant 0 : index
    %14 = vector.load %arg2[%13, %c0_8, %c0_9] : memref<2x1x8xf32, #tpu.memory_space<vmem>>, vector<1x1x8xf32>
    %15 = vector.shape_cast %14 : vector<1x1x8xf32> to vector<1x8xf32>
    %16 = arith.index_cast %12 : i32 to index
    %c0_10 = arith.constant 0 : index
    %17 = vector.load %arg8[%16, %c0_10] : memref<16x96xbf16, #tpu.memory_space<vmem>>, vector<8x8xbf16>
    %18 = arith.index_cast %12 : i32 to index
    %c32 = arith.constant 32 : index
    %19 = vector.load %arg8[%18, %c32] : memref<16x96xbf16, #tpu.memory_space<vmem>>, vector<8x8xbf16>
    %20 = arith.index_cast %12 : i32 to index
    %c64 = arith.constant 64 : index
    %21 = vector.load %arg8[%20, %c64] : memref<16x96xbf16, #tpu.memory_space<vmem>>, vector<8x8xbf16>
    %cst_11 = arith.constant dense<0.000000e+00> : vector<8x8xf32>
    %22 = tpu.matmul %17, %19, %cst_11 {dimension_numbers = #tpu.dot_dimension_numbers<[1], [1], [0], [0], [0, 0, 1, 0], [], []>} : vector<8x8xbf16>, vector<8x8xbf16>, vector<8x8xf32> -> vector<8x8xf32>
    %23 = vector.broadcast %15 : vector<1x8xf32> to vector<8x8xf32>
    %24 = arith.addf %22, %23 : vector<8x8xf32>
    %cst_12 = arith.constant dense<0xFF800000> : vector<8xf32>
    %25 = vector.multi_reduction <maximumf>, %24, %cst_12 [1] : vector<8x8xf32> to vector<8xf32>
    %26 = vector.shape_cast %25 : vector<8xf32> to vector<8x1xf32>
    %27 = vector.broadcast %26 : vector<8x1xf32> to vector<8x8xf32>
    %28 = arith.subf %24, %27 : vector<8x8xf32>
    %29 = math.exp %28 : vector<8x8xf32>
    %cst_13 = arith.constant dense<0.000000e+00> : vector<8xf32>
    %30 = vector.multi_reduction <add>, %29, %cst_13 [1] : vector<8x8xf32> to vector<8xf32>
    %31 = vector.shape_cast %30 : vector<8xf32> to vector<8x1xf32>
    %32 = tpu.reciprocal %31 {approx = true} : vector<8x1xf32> -> vector<8x1xf32>
    %33 = vector.broadcast %32 : vector<8x1xf32> to vector<8x8xf32>
    %34 = arith.mulf %29, %33 : vector<8x8xf32>
    %35 = arith.truncf %34 : vector<8x8xf32> to vector<8x8xbf16>
    %cst_14 = arith.constant dense<0.000000e+00> : vector<8x8xf32>
    %36 = tpu.matmul %35, %21, %cst_14 {dimension_numbers = #tpu.dot_dimension_numbers<[1], [0], [0], [1], [0, 0, 1, 1], [], []>} : vector<8x8xbf16>, vector<8x8xbf16>, vector<8x8xf32> -> vector<8x8xf32>
    %37 = arith.truncf %36 : vector<8x8xf32> to vector<8x8xbf16>
    %38 = arith.index_cast %12 : i32 to index
    %c0_15 = arith.constant 0 : index
    %39 = vector.load %arg9[%38, %c0_15] : memref<16x32xbf16, #tpu.memory_space<vmem>>, vector<8x8xbf16>
    tpu.vector_store %arg9[%38, %c0_15], %37 {strides = array<i32>} : memref<16x32xbf16, #tpu.memory_space<vmem>>, vector<8x8xbf16>,
    %40 = arith.index_cast %12 : i32 to index
    %c8 = arith.constant 8 : index
    %41 = vector.load %arg8[%40, %c8] : memref<16x96xbf16, #tpu.memory_space<vmem>>, vector<8x8xbf16>
    %42 = arith.index_cast %12 : i32 to index
    %c40 = arith.constant 40 : index
    %43 = vector.load %arg8[%42, %c40] : memref<16x96xbf16, #tpu.memory_space<vmem>>, vector<8x8xbf16>
    %44 = arith.index_cast %12 : i32 to index
    %c72 = arith.constant 72 : index
    %45 = vector.load %arg8[%44, %c72] : memref<16x96xbf16, #tpu.memory_space<vmem>>, vector<8x8xbf16>
    %cst_16 = arith.constant dense<0.000000e+00> : vector<8x8xf32>
    %46 = tpu.matmul %41, %43, %cst_16 {dimension_numbers = #tpu.dot_dimension_numbers<[1], [1], [0], [0], [0, 0, 1, 0], [], []>} : vector<8x8xbf16>, vector<8x8xbf16>, vector<8x8xf32> -> vector<8x8xf32>
    %47 = vector.broadcast %15 : vector<1x8xf32> to vector<8x8xf32>
    %48 = arith.addf %46, %47 : vector<8x8xf32>
    %cst_17 = arith.constant dense<0xFF800000> : vector<8xf32>
    %49 = vector.multi_reduction <maximumf>, %48, %cst_17 [1] : vector<8x8xf32> to vector<8xf32>
    %50 = vector.shape_cast %49 : vector<8xf32> to vector<8x1xf32>
    %51 = vector.broadcast %50 : vector<8x1xf32> to vector<8x8xf32>
    %52 = arith.subf %48, %51 : vector<8x8xf32>
    %53 = math.exp %52 : vector<8x8xf32>
    %cst_18 = arith.constant dense<0.000000e+00> : vector<8xf32>
    %54 = vector.multi_reduction <add>, %53, %cst_18 [1] : vector<8x8xf32> to vector<8xf32>
    %55 = vector.shape_cast %54 : vector<8xf32> to vector<8x1xf32>
    %56 = tpu.reciprocal %55 {approx = true} : vector<8x1xf32> -> vector<8x1xf32>
    %57 = vector.broadcast %56 : vector<8x1xf32> to vector<8x8xf32>
    %58 = arith.mulf %53, %57 : vector<8x8xf32>
    %59 = arith.truncf %58 : vector<8x8xf32> to vector<8x8xbf16>
    %cst_19 = arith.constant dense<0.000000e+00> : vector<8x8xf32>
    %60 = tpu.matmul %59, %45, %cst_19 {dimension_numbers = #tpu.dot_dimension_numbers<[1], [0], [0], [1], [0, 0, 1, 1], [], []>} : vector<8x8xbf16>, vector<8x8xbf16>, vector<8x8xf32> -> vector<8x8xf32>
    %61 = arith.truncf %60 : vector<8x8xf32> to vector<8x8xbf16>
    %62 = arith.index_cast %12 : i32 to index
    %c8_20 = arith.constant 8 : index
    %63 = vector.load %arg9[%62, %c8_20] : memref<16x32xbf16, #tpu.memory_space<vmem>>, vector<8x8xbf16>
    tpu.vector_store %arg9[%62, %c8_20], %61 {strides = array<i32>} : memref<16x32xbf16, #tpu.memory_space<vmem>>, vector<8x8xbf16>,
    %64 = arith.index_cast %12 : i32 to index
    %c16 = arith.constant 16 : index
    %65 = vector.load %arg8[%64, %c16] : memref<16x96xbf16, #tpu.memory_space<vmem>>, vector<8x8xbf16>
    %66 = arith.index_cast %12 : i32 to index
    %c48 = arith.constant 48 : index
    %67 = vector.load %arg8[%66, %c48] : memref<16x96xbf16, #tpu.memory_space<vmem>>, vector<8x8xbf16>
    %68 = arith.index_cast %12 : i32 to index
    %c80 = arith.constant 80 : index
    %69 = vector.load %arg8[%68, %c80] : memref<16x96xbf16, #tpu.memory_space<vmem>>, vector<8x8xbf16>
    %cst_21 = arith.constant dense<0.000000e+00> : vector<8x8xf32>
    %70 = tpu.matmul %65, %67, %cst_21 {dimension_numbers = #tpu.dot_dimension_numbers<[1], [1], [0], [0], [0, 0, 1, 0], [], []>} : vector<8x8xbf16>, vector<8x8xbf16>, vector<8x8xf32> -> vector<8x8xf32>
    %71 = vector.broadcast %15 : vector<1x8xf32> to vector<8x8xf32>
    %72 = arith.addf %70, %71 : vector<8x8xf32>
    %cst_22 = arith.constant dense<0xFF800000> : vector<8xf32>
    %73 = vector.multi_reduction <maximumf>, %72, %cst_22 [1] : vector<8x8xf32> to vector<8xf32>
    %74 = vector.shape_cast %73 : vector<8xf32> to vector<8x1xf32>
    %75 = vector.broadcast %74 : vector<8x1xf32> to vector<8x8xf32>
    %76 = arith.subf %72, %75 : vector<8x8xf32>
    %77 = math.exp %76 : vector<8x8xf32>
    %cst_23 = arith.constant dense<0.000000e+00> : vector<8xf32>
    %78 = vector.multi_reduction <add>, %77, %cst_23 [1] : vector<8x8xf32> to vector<8xf32>
    %79 = vector.shape_cast %78 : vector<8xf32> to vector<8x1xf32>
    %80 = tpu.reciprocal %79 {approx = true} : vector<8x1xf32> -> vector<8x1xf32>
    %81 = vector.broadcast %80 : vector<8x1xf32> to vector<8x8xf32>
    %82 = arith.mulf %77, %81 : vector<8x8xf32>
    %83 = arith.truncf %82 : vector<8x8xf32> to vector<8x8xbf16>
    %cst_24 = arith.constant dense<0.000000e+00> : vector<8x8xf32>
    %84 = tpu.matmul %83, %69, %cst_24 {dimension_numbers = #tpu.dot_dimension_numbers<[1], [0], [0], [1], [0, 0, 1, 1], [], []>} : vector<8x8xbf16>, vector<8x8xbf16>, vector<8x8xf32> -> vector<8x8xf32>
    %85 = arith.truncf %84 : vector<8x8xf32> to vector<8x8xbf16>
    %86 = arith.index_cast %12 : i32 to index
    %c16_25 = arith.constant 16 : index
    %87 = vector.load %arg9[%86, %c16_25] : memref<16x32xbf16, #tpu.memory_space<vmem>>, vector<8x8xbf16>
    tpu.vector_store %arg9[%86, %c16_25], %85 {strides = array<i32>} : memref<16x32xbf16, #tpu.memory_space<vmem>>, vector<8x8xbf16>,
    %88 = arith.index_cast %12 : i32 to index
    %c24 = arith.constant 24 : index
    %89 = vector.load %arg8[%88, %c24] : memref<16x96xbf16, #tpu.memory_space<vmem>>, vector<8x8xbf16>
    %90 = arith.index_cast %12 : i32 to index
    %c56 = arith.constant 56 : index
    %91 = vector.load %arg8[%90, %c56] : memref<16x96xbf16, #tpu.memory_space<vmem>>, vector<8x8xbf16>
    %92 = arith.index_cast %12 : i32 to index
    %c88 = arith.constant 88 : index
    %93 = vector.load %arg8[%92, %c88] : memref<16x96xbf16, #tpu.memory_space<vmem>>, vector<8x8xbf16>
    %cst_26 = arith.constant dense<0.000000e+00> : vector<8x8xf32>
    %94 = tpu.matmul %89, %91, %cst_26 {dimension_numbers = #tpu.dot_dimension_numbers<[1], [1], [0], [0], [0, 0, 1, 0], [], []>} : vector<8x8xbf16>, vector<8x8xbf16>, vector<8x8xf32> -> vector<8x8xf32>
    %95 = vector.broadcast %15 : vector<1x8xf32> to vector<8x8xf32>
    %96 = arith.addf %94, %95 : vector<8x8xf32>
    %cst_27 = arith.constant dense<0xFF800000> : vector<8xf32>
    %97 = vector.multi_reduction <maximumf>, %96, %cst_27 [1] : vector<8x8xf32> to vector<8xf32>
    %98 = vector.shape_cast %97 : vector<8xf32> to vector<8x1xf32>
    %99 = vector.broadcast %98 : vector<8x1xf32> to vector<8x8xf32>
    %100 = arith.subf %96, %99 : vector<8x8xf32>
    %101 = math.exp %100 : vector<8x8xf32>
    %cst_28 = arith.constant dense<0.000000e+00> : vector<8xf32>
    %102 = vector.multi_reduction <add>, %101, %cst_28 [1] : vector<8x8xf32> to vector<8xf32>
    %103 = vector.shape_cast %102 : vector<8xf32> to vector<8x1xf32>
    %104 = tpu.reciprocal %103 {approx = true} : vector<8x1xf32> -> vector<8x1xf32>
    %105 = vector.broadcast %104 : vector<8x1xf32> to vector<8x8xf32>
    %106 = arith.mulf %101, %105 : vector<8x8xf32>
    %107 = arith.truncf %106 : vector<8x8xf32> to vector<8x8xbf16>
    %cst_29 = arith.constant dense<0.000000e+00> : vector<8x8xf32>
    %108 = tpu.matmul %107, %93, %cst_29 {dimension_numbers = #tpu.dot_dimension_numbers<[1], [0], [0], [1], [0, 0, 1, 1], [], []>} : vector<8x8xbf16>, vector<8x8xbf16>, vector<8x8xf32> -> vector<8x8xf32>
    %109 = arith.truncf %108 : vector<8x8xf32> to vector<8x8xbf16>
    %110 = arith.index_cast %12 : i32 to index
    %c24_30 = arith.constant 24 : index
    %111 = vector.load %arg9[%110, %c24_30] : memref<16x32xbf16, #tpu.memory_space<vmem>>, vector<8x8xbf16>
    tpu.vector_store %arg9[%110, %c24_30], %109 {strides = array<i32>} : memref<16x32xbf16, #tpu.memory_space<vmem>>, vector<8x8xbf16>,
    %c1_i32 = arith.constant 1 : i32
    %c8_i32_31 = arith.constant 8 : i32
    %112 = arith.muli %c1_i32, %c8_i32_31 : i32
    %113 = tpu.assume_multiple %112, 8 : i32
    %114 = arith.index_cast %c1_i32 : i32 to index
    %c0_32 = arith.constant 0 : index
    %c0_33 = arith.constant 0 : index
    %115 = vector.load %arg2[%114, %c0_32, %c0_33] : memref<2x1x8xf32, #tpu.memory_space<vmem>>, vector<1x1x8xf32>
    %116 = vector.shape_cast %115 : vector<1x1x8xf32> to vector<1x8xf32>
    %117 = arith.index_cast %113 : i32 to index
    %c0_34 = arith.constant 0 : index
    %118 = vector.load %arg8[%117, %c0_34] : memref<16x96xbf16, #tpu.memory_space<vmem>>, vector<8x8xbf16>
    %119 = arith.index_cast %113 : i32 to index
    %c32_35 = arith.constant 32 : index
    %120 = vector.load %arg8[%119, %c32_35] : memref<16x96xbf16, #tpu.memory_space<vmem>>, vector<8x8xbf16>
    %121 = arith.index_cast %113 : i32 to index
    %c64_36 = arith.constant 64 : index
    %122 = vector.load %arg8[%121, %c64_36] : memref<16x96xbf16, #tpu.memory_space<vmem>>, vector<8x8xbf16>
    %cst_37 = arith.constant dense<0.000000e+00> : vector<8x8xf32>
    %123 = tpu.matmul %118, %120, %cst_37 {dimension_numbers = #tpu.dot_dimension_numbers<[1], [1], [0], [0], [0, 0, 1, 0], [], []>} : vector<8x8xbf16>, vector<8x8xbf16>, vector<8x8xf32> -> vector<8x8xf32>
    %124 = vector.broadcast %116 : vector<1x8xf32> to vector<8x8xf32>
    %125 = arith.addf %123, %124 : vector<8x8xf32>
    %cst_38 = arith.constant dense<0xFF800000> : vector<8xf32>
    %126 = vector.multi_reduction <maximumf>, %125, %cst_38 [1] : vector<8x8xf32> to vector<8xf32>
    %127 = vector.shape_cast %126 : vector<8xf32> to vector<8x1xf32>
    %128 = vector.broadcast %127 : vector<8x1xf32> to vector<8x8xf32>
    %129 = arith.subf %125, %128 : vector<8x8xf32>
    %130 = math.exp %129 : vector<8x8xf32>
    %cst_39 = arith.constant dense<0.000000e+00> : vector<8xf32>
    %131 = vector.multi_reduction <add>, %130, %cst_39 [1] : vector<8x8xf32> to vector<8xf32>
    %132 = vector.shape_cast %131 : vector<8xf32> to vector<8x1xf32>
    %133 = tpu.reciprocal %132 {approx = true} : vector<8x1xf32> -> vector<8x1xf32>
    %134 = vector.broadcast %133 : vector<8x1xf32> to vector<8x8xf32>
    %135 = arith.mulf %130, %134 : vector<8x8xf32>
    %136 = arith.truncf %135 : vector<8x8xf32> to vector<8x8xbf16>
    %cst_40 = arith.constant dense<0.000000e+00> : vector<8x8xf32>
    %137 = tpu.matmul %136, %122, %cst_40 {dimension_numbers = #tpu.dot_dimension_numbers<[1], [0], [0], [1], [0, 0, 1, 1], [], []>} : vector<8x8xbf16>, vector<8x8xbf16>, vector<8x8xf32> -> vector<8x8xf32>
    %138 = arith.truncf %137 : vector<8x8xf32> to vector<8x8xbf16>
    %139 = arith.index_cast %113 : i32 to index
    %c0_41 = arith.constant 0 : index
    %140 = vector.load %arg9[%139, %c0_41] : memref<16x32xbf16, #tpu.memory_space<vmem>>, vector<8x8xbf16>
    tpu.vector_store %arg9[%139, %c0_41], %138 {strides = array<i32>} : memref<16x32xbf16, #tpu.memory_space<vmem>>, vector<8x8xbf16>,
    %141 = arith.index_cast %113 : i32 to index
    %c8_42 = arith.constant 8 : index
    %142 = vector.load %arg8[%141, %c8_42] : memref<16x96xbf16, #tpu.memory_space<vmem>>, vector<8x8xbf16>
    %143 = arith.index_cast %113 : i32 to index
    %c40_43 = arith.constant 40 : index
    %144 = vector.load %arg8[%143, %c40_43] : memref<16x96xbf16, #tpu.memory_space<vmem>>, vector<8x8xbf16>
    %145 = arith.index_cast %113 : i32 to index
    %c72_44 = arith.constant 72 : index
    %146 = vector.load %arg8[%145, %c72_44] : memref<16x96xbf16, #tpu.memory_space<vmem>>, vector<8x8xbf16>
    %cst_45 = arith.constant dense<0.000000e+00> : vector<8x8xf32>
    %147 = tpu.matmul %142, %144, %cst_45 {dimension_numbers = #tpu.dot_dimension_numbers<[1], [1], [0], [0], [0, 0, 1, 0], [], []>} : vector<8x8xbf16>, vector<8x8xbf16>, vector<8x8xf32> -> vector<8x8xf32>
    %148 = vector.broadcast %116 : vector<1x8xf32> to vector<8x8xf32>
    %149 = arith.addf %147, %148 : vector<8x8xf32>
    %cst_46 = arith.constant dense<0xFF800000> : vector<8xf32>
    %150 = vector.multi_reduction <maximumf>, %149, %cst_46 [1] : vector<8x8xf32> to vector<8xf32>
    %151 = vector.shape_cast %150 : vector<8xf32> to vector<8x1xf32>
    %152 = vector.broadcast %151 : vector<8x1xf32> to vector<8x8xf32>
    %153 = arith.subf %149, %152 : vector<8x8xf32>
    %154 = math.exp %153 : vector<8x8xf32>
    %cst_47 = arith.constant dense<0.000000e+00> : vector<8xf32>
    %155 = vector.multi_reduction <add>, %154, %cst_47 [1] : vector<8x8xf32> to vector<8xf32>
    %156 = vector.shape_cast %155 : vector<8xf32> to vector<8x1xf32>
    %157 = tpu.reciprocal %156 {approx = true} : vector<8x1xf32> -> vector<8x1xf32>
    %158 = vector.broadcast %157 : vector<8x1xf32> to vector<8x8xf32>
    %159 = arith.mulf %154, %158 : vector<8x8xf32>
    %160 = arith.truncf %159 : vector<8x8xf32> to vector<8x8xbf16>
    %cst_48 = arith.constant dense<0.000000e+00> : vector<8x8xf32>
    %161 = tpu.matmul %160, %146, %cst_48 {dimension_numbers = #tpu.dot_dimension_numbers<[1], [0], [0], [1], [0, 0, 1, 1], [], []>} : vector<8x8xbf16>, vector<8x8xbf16>, vector<8x8xf32> -> vector<8x8xf32>
    %162 = arith.truncf %161 : vector<8x8xf32> to vector<8x8xbf16>
    %163 = arith.index_cast %113 : i32 to index
    %c8_49 = arith.constant 8 : index
    %164 = vector.load %arg9[%163, %c8_49] : memref<16x32xbf16, #tpu.memory_space<vmem>>, vector<8x8xbf16>
    tpu.vector_store %arg9[%163, %c8_49], %162 {strides = array<i32>} : memref<16x32xbf16, #tpu.memory_space<vmem>>, vector<8x8xbf16>,
    %165 = arith.index_cast %113 : i32 to index
    %c16_50 = arith.constant 16 : index
    %166 = vector.load %arg8[%165, %c16_50] : memref<16x96xbf16, #tpu.memory_space<vmem>>, vector<8x8xbf16>
    %167 = arith.index_cast %113 : i32 to index
    %c48_51 = arith.constant 48 : index
    %168 = vector.load %arg8[%167, %c48_51] : memref<16x96xbf16, #tpu.memory_space<vmem>>, vector<8x8xbf16>
    %169 = arith.index_cast %113 : i32 to index
    %c80_52 = arith.constant 80 : index
    %170 = vector.load %arg8[%169, %c80_52] : memref<16x96xbf16, #tpu.memory_space<vmem>>, vector<8x8xbf16>
    %cst_53 = arith.constant dense<0.000000e+00> : vector<8x8xf32>
    %171 = tpu.matmul %166, %168, %cst_53 {dimension_numbers = #tpu.dot_dimension_numbers<[1], [1], [0], [0], [0, 0, 1, 0], [], []>} : vector<8x8xbf16>, vector<8x8xbf16>, vector<8x8xf32> -> vector<8x8xf32>
    %172 = vector.broadcast %116 : vector<1x8xf32> to vector<8x8xf32>
    %173 = arith.addf %171, %172 : vector<8x8xf32>
    %cst_54 = arith.constant dense<0xFF800000> : vector<8xf32>
    %174 = vector.multi_reduction <maximumf>, %173, %cst_54 [1] : vector<8x8xf32> to vector<8xf32>
    %175 = vector.shape_cast %174 : vector<8xf32> to vector<8x1xf32>
    %176 = vector.broadcast %175 : vector<8x1xf32> to vector<8x8xf32>
    %177 = arith.subf %173, %176 : vector<8x8xf32>
    %178 = math.exp %177 : vector<8x8xf32>
    %cst_55 = arith.constant dense<0.000000e+00> : vector<8xf32>
    %179 = vector.multi_reduction <add>, %178, %cst_55 [1] : vector<8x8xf32> to vector<8xf32>
    %180 = vector.shape_cast %179 : vector<8xf32> to vector<8x1xf32>
    %181 = tpu.reciprocal %180 {approx = true} : vector<8x1xf32> -> vector<8x1xf32>
    %182 = vector.broadcast %181 : vector<8x1xf32> to vector<8x8xf32>
    %183 = arith.mulf %178, %182 : vector<8x8xf32>
    %184 = arith.truncf %183 : vector<8x8xf32> to vector<8x8xbf16>
    %cst_56 = arith.constant dense<0.000000e+00> : vector<8x8xf32>
    %185 = tpu.matmul %184, %170, %cst_56 {dimension_numbers = #tpu.dot_dimension_numbers<[1], [0], [0], [1], [0, 0, 1, 1], [], []>} : vector<8x8xbf16>, vector<8x8xbf16>, vector<8x8xf32> -> vector<8x8xf32>
    %186 = arith.truncf %185 : vector<8x8xf32> to vector<8x8xbf16>
    %187 = arith.index_cast %113 : i32 to index
    %c16_57 = arith.constant 16 : index
    %188 = vector.load %arg9[%187, %c16_57] : memref<16x32xbf16, #tpu.memory_space<vmem>>, vector<8x8xbf16>
    tpu.vector_store %arg9[%187, %c16_57], %186 {strides = array<i32>} : memref<16x32xbf16, #tpu.memory_space<vmem>>, vector<8x8xbf16>,
    %189 = arith.index_cast %113 : i32 to index
    %c24_58 = arith.constant 24 : index
    %190 = vector.load %arg8[%189, %c24_58] : memref<16x96xbf16, #tpu.memory_space<vmem>>, vector<8x8xbf16>
    %191 = arith.index_cast %113 : i32 to index
    %c56_59 = arith.constant 56 : index
    %192 = vector.load %arg8[%191, %c56_59] : memref<16x96xbf16, #tpu.memory_space<vmem>>, vector<8x8xbf16>
    %193 = arith.index_cast %113 : i32 to index
    %c88_60 = arith.constant 88 : index
    %194 = vector.load %arg8[%193, %c88_60] : memref<16x96xbf16, #tpu.memory_space<vmem>>, vector<8x8xbf16>
    %cst_61 = arith.constant dense<0.000000e+00> : vector<8x8xf32>
    %195 = tpu.matmul %190, %192, %cst_61 {dimension_numbers = #tpu.dot_dimension_numbers<[1], [1], [0], [0], [0, 0, 1, 0], [], []>} : vector<8x8xbf16>, vector<8x8xbf16>, vector<8x8xf32> -> vector<8x8xf32>
    %196 = vector.broadcast %116 : vector<1x8xf32> to vector<8x8xf32>
    %197 = arith.addf %195, %196 : vector<8x8xf32>
    %cst_62 = arith.constant dense<0xFF800000> : vector<8xf32>
    %198 = vector.multi_reduction <maximumf>, %197, %cst_62 [1] : vector<8x8xf32> to vector<8xf32>
    %199 = vector.shape_cast %198 : vector<8xf32> to vector<8x1xf32>
    %200 = vector.broadcast %199 : vector<8x1xf32> to vector<8x8xf32>
    %201 = arith.subf %197, %200 : vector<8x8xf32>
    %202 = math.exp %201 : vector<8x8xf32>
    %cst_63 = arith.constant dense<0.000000e+00> : vector<8xf32>
    %203 = vector.multi_reduction <add>, %202, %cst_63 [1] : vector<8x8xf32> to vector<8xf32>
    %204 = vector.shape_cast %203 : vector<8xf32> to vector<8x1xf32>
    %205 = tpu.reciprocal %204 {approx = true} : vector<8x1xf32> -> vector<8x1xf32>
    %206 = vector.broadcast %205 : vector<8x1xf32> to vector<8x8xf32>
    %207 = arith.mulf %202, %206 : vector<8x8xf32>
    %208 = arith.truncf %207 : vector<8x8xf32> to vector<8x8xbf16>
    %cst_64 = arith.constant dense<0.000000e+00> : vector<8x8xf32>
    %209 = tpu.matmul %208, %194, %cst_64 {dimension_numbers = #tpu.dot_dimension_numbers<[1], [0], [0], [1], [0, 0, 1, 1], [], []>} : vector<8x8xbf16>, vector<8x8xbf16>, vector<8x8xf32> -> vector<8x8xf32>
    %210 = arith.truncf %209 : vector<8x8xf32> to vector<8x8xbf16>
    %211 = arith.index_cast %113 : i32 to index
    %c24_65 = arith.constant 24 : index
    %212 = vector.load %arg9[%211, %c24_65] : memref<16x32xbf16, #tpu.memory_space<vmem>>, vector<8x8xbf16>
    tpu.vector_store %arg9[%211, %c24_65], %210 {strides = array<i32>} : memref<16x32xbf16, #tpu.memory_space<vmem>>, vector<8x8xbf16>,
    %c2_i32 = arith.constant 2 : i32
    %c0_66 = arith.constant 0 : index
    %c0_67 = arith.constant 0 : index
    %213 = vector.load %arg9[%c0_66, %c0_67] : memref<16x32xbf16, #tpu.memory_space<vmem>>, vector<16x32xbf16>
    %c0_68 = arith.constant 0 : index
    %c0_69 = arith.constant 0 : index
    %214 = vector.load %arg5[%c0_68, %c0_69] : memref<32x32xbf16, #tpu.memory_space<vmem>>, vector<32x32xbf16>
    %cst_70 = arith.constant dense<0.000000e+00> : vector<16x32xf32>
    %215 = tpu.matmul %213, %214, %cst_70 {dimension_numbers = #tpu.dot_dimension_numbers<[1], [0], [0], [1], [0, 0, 1, 1], [], []>} : vector<16x32xbf16>, vector<32x32xbf16>, vector<16x32xf32> -> vector<16x32xf32>
    %c0_71 = arith.constant 0 : index
    %c0_72 = arith.constant 0 : index
    %216 = vector.load %arg6[%c0_71, %c0_72] : memref<1x32xf32, #tpu.memory_space<vmem>>, vector<1x32xf32>
    %217 = vector.shape_cast %216 : vector<1x32xf32> to vector<32xf32>
    %218 = vector.shape_cast %217 : vector<32xf32> to vector<1x32xf32>
    %219 = vector.broadcast %218 : vector<1x32xf32> to vector<16x32xf32>
    %220 = arith.addf %215, %219 : vector<16x32xf32>
    %221 = vector.shape_cast %220 : vector<16x32xf32> to vector<2x8x32xf32>
    %c0_73 = arith.constant 0 : index
    %c0_74 = arith.constant 0 : index
    %c0_75 = arith.constant 0 : index
    %222 = vector.load %arg7[%c0_73, %c0_74, %c0_75] : memref<2x8x32xf32, #tpu.memory_space<vmem>>, vector<2x8x32xf32>
    tpu.vector_store %arg7[%c0_73, %c0_74, %c0_75], %221 {strides = array<i32>} : memref<2x8x32xf32, #tpu.memory_space<vmem>>, vector<2x8x32xf32>,
    return
  }
  func.func @transform_0(%arg0: i32) -> (i32, i32, i32) {
    %c0_i32 = arith.constant 0 : i32
    %c0_i32_0 = arith.constant 0 : i32
    %c0_i32_1 = arith.constant 0 : i32
    return %arg0, %c0_i32, %c0_i32_0 : i32, i32, i32
  }
  func.func @transform_1(%arg0: i32) -> (i32, i32, i32) {
    %c0_i32 = arith.constant 0 : i32
    %c0_i32_0 = arith.constant 0 : i32
    %c0_i32_1 = arith.constant 0 : i32
    return %arg0, %c0_i32, %c0_i32_0 : i32, i32, i32
  }
  func.func @transform_2(%arg0: i32) -> (i32, i32) {
    %c0_i32 = arith.constant 0 : i32
    %c0_i32_0 = arith.constant 0 : i32
    %c0_i32_1 = arith.constant 0 : i32
    return %c0_i32, %c0_i32_0 : i32, i32
  }
  func.func @transform_3(%arg0: i32) -> (i32, i32) {
    %c0_i32 = arith.constant 0 : i32
    %c0_i32_0 = arith.constant 0 : i32
    %c0_i32_1 = arith.constant 0 : i32
    return %c0_i32, %c0_i32_0 : i32, i32
  }
  func.func @transform_4(%arg0: i32) -> (i32, i32) {
    %c0_i32 = arith.constant 0 : i32
    %c0_i32_0 = arith.constant 0 : i32
    %c0_i32_1 = arith.constant 0 : i32
    return %c0_i32, %c0_i32_0 : i32, i32
  }
  func.func @transform_5(%arg0: i32) -> (i32, i32) {
    %c0_i32 = arith.constant 0 : i32
    %c0_i32_0 = arith.constant 0 : i32
    %c0_i32_1 = arith.constant 0 : i32
    return %c0_i32, %c0_i32_0 : i32, i32
  }
  func.func @transform_6(%arg0: i32) -> (i32, i32, i32) {
    %c0_i32 = arith.constant 0 : i32
    %c0_i32_0 = arith.constant 0 : i32
    %c0_i32_1 = arith.constant 0 : i32
    return %arg0, %c0_i32, %c0_i32_0 : i32, i32, i32
  }
}

module attributes {stable_mosaic.version = 11 : i64} {
  func.func @_mha_kernel(%arg0: i32, %arg1: memref<2x8x32xbf16, #tpu.memory_space<vmem>>, %arg2: memref<2x1x8xf32, #tpu.memory_space<vmem>>, %arg3: memref<32x96xbf16, #tpu.memory_space<vmem>>, %arg4: memref<1x96xf32, #tpu.memory_space<vmem>>, %arg5: memref<32x32xbf16, #tpu.memory_space<vmem>>, %arg6: memref<1x32xf32, #tpu.memory_space<vmem>>, %arg7: memref<2x8x32xf32, #tpu.memory_space<vmem>>, %arg8: memref<16x96xbf16, #tpu.memory_space<vmem>>, %arg9: memref<16x32xbf16, #tpu.memory_space<vmem>>) attributes {dimension_semantics = [#tpu.dimension_semantics<parallel>], iteration_bounds = array<i64: 1>, scalar_prefetch = 0 : i64, scratch_operands = 2 : i64, tpu.core_type = #tpu.core_type<tc>, window_params = [{transform_indices = @transform_0, window_bounds = array<i64: 2, 8, 32>}, {transform_indices = @transform_1, window_bounds = array<i64: 2, 1, 8>}, {pipeline_mode = #tpu.pipeline_mode<synchronous>, transform_indices = @transform_2, window_bounds = array<i64: 32, 96>}, {pipeline_mode = #tpu.pipeline_mode<synchronous>, transform_indices = @transform_3, window_bounds = array<i64: 1, 96>}, {pipeline_mode = #tpu.pipeline_mode<synchronous>, transform_indices = @transform_4, window_bounds = array<i64: 32, 32>}, {pipeline_mode = #tpu.pipeline_mode<synchronous>, transform_indices = @transform_5, window_bounds = array<i64: 1, 32>}, {transform_indices = @transform_6, window_bounds = array<i64: 2, 8, 32>}]} {
    %c0 = arith.constant 0 : index
    %c0_0 = arith.constant 0 : index
    %c0_1 = arith.constant 0 : index
    %0 = vector.load %arg1[%c0, %c0_0, %c0_1] : memref<2x8x32xbf16, #tpu.memory_space<vmem>>, vector<2x8x32xbf16>
    %1 = vector.shape_cast %0 : vector<2x8x32xbf16> to vector<16x32xbf16>
    %c0_2 = arith.constant 0 : index
    %c0_3 = arith.constant 0 : index
    %2 = vector.load %arg3[%c0_2, %c0_3] : memref<32x96xbf16, #tpu.memory_space<vmem>>, vector<32x96xbf16>
    %cst = arith.constant dense<0.000000e+00> : vector<16x96xf32>
    %3 = tpu.matmul %1, %2, %cst {dimension_numbers = #tpu.dot_dimension_numbers<[1], [0], [0], [1], [0, 0, 1, 1], [], []>} : vector<16x32xbf16>, vector<32x96xbf16>, vector<16x96xf32> -> vector<16x96xf32>
    %c0_4 = arith.constant 0 : index
    %c0_5 = arith.constant 0 : index
    %4 = vector.load %arg4[%c0_4, %c0_5] : memref<1x96xf32, #tpu.memory_space<vmem>>, vector<1x96xf32>
    %5 = vector.shape_cast %4 : vector<1x96xf32> to vector<96xf32>
    %6 = vector.shape_cast %5 : vector<96xf32> to vector<1x96xf32>
    %7 = vector.broadcast %6 : vector<1x96xf32> to vector<16x96xf32>
    %8 = arith.addf %3, %7 : vector<16x96xf32>
    %9 = arith.truncf %8 : vector<16x96xf32> to vector<16x96xbf16>
    %c0_6 = arith.constant 0 : index
    %c0_7 = arith.constant 0 : index
    %10 = vector.load %arg8[%c0_6, %c0_7] : memref<16x96xbf16, #tpu.memory_space<vmem>>, vector<16x96xbf16>
    tpu.vector_store %arg8[%c0_6, %c0_7], %9 {strides = array<i32>} : memref<16x96xbf16, #tpu.memory_space<vmem>>, vector<16x96xbf16>,
    %c0_i32 = arith.constant 0 : i32
    %c8_i32 = arith.constant 8 : i32
    %11 = arith.muli %c0_i32, %c8_i32 : i32
    %12 = tpu.assume_multiple %11, 8 : i32
    %13 = arith.index_cast %c0_i32 : i32 to index
    %c0_8 = arith.constant 0 : index
    %c0_9 = arith.constant 0 : index
    %14 = vector.load %arg2[%13, %c0_8, %c0_9] : memref<2x1x8xf32, #tpu.memory_space<vmem>>, vector<1x1x8xf32>
    %15 = vector.shape_cast %14 : vector<1x1x8xf32> to vector<1x8xf32>
    %16 = arith.index_cast %12 : i32 to index
    %c0_10 = arith.constant 0 : index
    %17 = vector.load %arg8[%16, %c0_10] : memref<16x96xbf16, #tpu.memory_space<vmem>>, vector<8x8xbf16>
    %18 = arith.index_cast %12 : i32 to index
    %c32 = arith.constant 32 : index
    %19 = vector.load %arg8[%18, %c32] : memref<16x96xbf16, #tpu.memory_space<vmem>>, vector<8x8xbf16>
    %20 = arith.index_cast %12 : i32 to index
    %c64 = arith.constant 64 : index
    %21 = vector.load %arg8[%20, %c64] : memref<16x96xbf16, #tpu.memory_space<vmem>>, vector<8x8xbf16>
    %cst_11 = arith.constant dense<0.000000e+00> : vector<8x8xf32>
    %22 = tpu.matmul %17, %19, %cst_11 {dimension_numbers = #tpu.dot_dimension_numbers<[1], [1], [0], [0], [0, 0, 1, 0], [], []>} : vector<8x8xbf16>, vector<8x8xbf16>, vector<8x8xf32> -> vector<8x8xf32>
    %23 = vector.broadcast %15 : vector<1x8xf32> to vector<8x8xf32>
    %24 = arith.addf %22, %23 : vector<8x8xf32>
    %cst_12 = arith.constant dense<0xFF800000> : vector<8xf32>
    %25 = vector.multi_reduction <maximumf>, %24, %cst_12 [1] : vector<8x8xf32> to vector<8xf32>
    %26 = vector.shape_cast %25 : vector<8xf32> to vector<8x1xf32>
    %27 = vector.broadcast %26 : vector<8x1xf32> to vector<8x8xf32>
    %28 = arith.subf %24, %27 : vector<8x8xf32>
    %29 = math.exp %28 : vector<8x8xf32>
    %cst_13 = arith.constant dense<0.000000e+00> : vector<8xf32>
    %30 = vector.multi_reduction <add>, %29, %cst_13 [1] : vector<8x8xf32> to vector<8xf32>
    %31 = vector.shape_cast %30 : vector<8xf32> to vector<8x1xf32>
    %32 = tpu.reciprocal %31 {approx = true} : vector<8x1xf32> -> vector<8x1xf32>
    %33 = vector.broadcast %32 : vector<8x1xf32> to vector<8x8xf32>
    %34 = arith.mulf %29, %33 : vector<8x8xf32>
    %35 = arith.truncf %34 : vector<8x8xf32> to vector<8x8xbf16>
    %cst_14 = arith.constant dense<0.000000e+00> : vector<8x8xf32>
    %36 = tpu.matmul %35, %21, %cst_14 {dimension_numbers = #tpu.dot_dimension_numbers<[1], [0], [0], [1], [0, 0, 1, 1], [], []>} : vector<8x8xbf16>, vector<8x8xbf16>, vector<8x8xf32> -> vector<8x8xf32>
    %37 = arith.truncf %36 : vector<8x8xf32> to vector<8x8xbf16>
    %38 = arith.index_cast %12 : i32 to index
    %c0_15 = arith.constant 0 : index
    %39 = vector.load %arg9[%38, %c0_15] : memref<16x32xbf16, #tpu.memory_space<vmem>>, vector<8x8xbf16>
    tpu.vector_store %arg9[%38, %c0_15], %37 {strides = array<i32>} : memref<16x32xbf16, #tpu.memory_space<vmem>>, vector<8x8xbf16>,
    %40 = arith.index_cast %12 : i32 to index
    %c8 = arith.constant 8 : index
    %41 = vector.load %arg8[%40, %c8] : memref<16x96xbf16, #tpu.memory_space<vmem>>, vector<8x8xbf16>
    %42 = arith.index_cast %12 : i32 to index
    %c40 = arith.constant 40 : index
    %43 = vector.load %arg8[%42, %c40] : memref<16x96xbf16, #tpu.memory_space<vmem>>, vector<8x8xbf16>
    %44 = arith.index_cast %12 : i32 to index
    %c72 = arith.constant 72 : index
    %45 = vector.load %arg8[%44, %c72] : memref<16x96xbf16, #tpu.memory_space<vmem>>, vector<8x8xbf16>
    %cst_16 = arith.constant dense<0.000000e+00> : vector<8x8xf32>
    %46 = tpu.matmul %41, %43, %cst_16 {dimension_numbers = #tpu.dot_dimension_numbers<[1], [1], [0], [0], [0, 0, 1, 0], [], []>} : vector<8x8xbf16>, vector<8x8xbf16>, vector<8x8xf32> -> vector<8x8xf32>
    %47 = vector.broadcast %15 : vector<1x8xf32> to vector<8x8xf32>
    %48 = arith.addf %46, %47 : vector<8x8xf32>
    %cst_17 = arith.constant dense<0xFF800000> : vector<8xf32>
    %49 = vector.multi_reduction <maximumf>, %48, %cst_17 [1] : vector<8x8xf32> to vector<8xf32>
    %50 = vector.shape_cast %49 : vector<8xf32> to vector<8x1xf32>
    %51 = vector.broadcast %50 : vector<8x1xf32> to vector<8x8xf32>
    %52 = arith.subf %48, %51 : vector<8x8xf32>
    %53 = math.exp %52 : vector<8x8xf32>
    %cst_18 = arith.constant dense<0.000000e+00> : vector<8xf32>
    %54 = vector.multi_reduction <add>, %53, %cst_18 [1] : vector<8x8xf32> to vector<8xf32>
    %55 = vector.shape_cast %54 : vector<8xf32> to vector<8x1xf32>
    %56 = tpu.reciprocal %55 {approx = true} : vector<8x1xf32> -> vector<8x1xf32>
    %57 = vector.broadcast %56 : vector<8x1xf32> to vector<8x8xf32>
    %58 = arith.mulf %53, %57 : vector<8x8xf32>
    %59 = arith.truncf %58 : vector<8x8xf32> to vector<8x8xbf16>
    %cst_19 = arith.constant dense<0.000000e+00> : vector<8x8xf32>
    %60 = tpu.matmul %59, %45, %cst_19 {dimension_numbers = #tpu.dot_dimension_numbers<[1], [0], [0], [1], [0, 0, 1, 1], [], []>} : vector<8x8xbf16>, vector<8x8xbf16>, vector<8x8xf32> -> vector<8x8xf32>
    %61 = arith.truncf %60 : vector<8x8xf32> to vector<8x8xbf16>
    %62 = arith.index_cast %12 : i32 to index
    %c8_20 = arith.constant 8 : index
    %63 = vector.load %arg9[%62, %c8_20] : memref<16x32xbf16, #tpu.memory_space<vmem>>, vector<8x8xbf16>
    tpu.vector_store %arg9[%62, %c8_20], %61 {strides = array<i32>} : memref<16x32xbf16, #tpu.memory_space<vmem>>, vector<8x8xbf16>,
    %64 = arith.index_cast %12 : i32 to index
    %c16 = arith.constant 16 : index
    %65 = vector.load %arg8[%64, %c16] : memref<16x96xbf16, #tpu.memory_space<vmem>>, vector<8x8xbf16>
    %66 = arith.index_cast %12 : i32 to index
    %c48 = arith.constant 48 : index
    %67 = vector.load %arg8[%66, %c48] : memref<16x96xbf16, #tpu.memory_space<vmem>>, vector<8x8xbf16>
    %68 = arith.index_cast %12 : i32 to index
    %c80 = arith.constant 80 : index
    %69 = vector.load %arg8[%68, %c80] : memref<16x96xbf16, #tpu.memory_space<vmem>>, vector<8x8xbf16>
    %cst_21 = arith.constant dense<0.000000e+00> : vector<8x8xf32>
    %70 = tpu.matmul %65, %67, %cst_21 {dimension_numbers = #tpu.dot_dimension_numbers<[1], [1], [0], [0], [0, 0, 1, 0], [], []>} : vector<8x8xbf16>, vector<8x8xbf16>, vector<8x8xf32> -> vector<8x8xf32>
    %71 = vector.broadcast %15 : vector<1x8xf32> to vector<8x8xf32>
    %72 = arith.addf %70, %71 : vector<8x8xf32>
    %cst_22 = arith.constant dense<0xFF800000> : vector<8xf32>
    %73 = vector.multi_reduction <maximumf>, %72, %cst_22 [1] : vector<8x8xf32> to vector<8xf32>
    %74 = vector.shape_cast %73 : vector<8xf32> to vector<8x1xf32>
    %75 = vector.broadcast %74 : vector<8x1xf32> to vector<8x8xf32>
    %76 = arith.subf %72, %75 : vector<8x8xf32>
    %77 = math.exp %76 : vector<8x8xf32>
    %cst_23 = arith.constant dense<0.000000e+00> : vector<8xf32>
    %78 = vector.multi_reduction <add>, %77, %cst_23 [1] : vector<8x8xf32> to vector<8xf32>
    %79 = vector.shape_cast %78 : vector<8xf32> to vector<8x1xf32>
    %80 = tpu.reciprocal %79 {approx = true} : vector<8x1xf32> -> vector<8x1xf32>
    %81 = vector.broadcast %80 : vector<8x1xf32> to vector<8x8xf32>
    %82 = arith.mulf %77, %81 : vector<8x8xf32>
    %83 = arith.truncf %82 : vector<8x8xf32> to vector<8x8xbf16>
    %cst_24 = arith.constant dense<0.000000e+00> : vector<8x8xf32>
    %84 = tpu.matmul %83, %69, %cst_24 {dimension_numbers = #tpu.dot_dimension_numbers<[1], [0], [0], [1], [0, 0, 1, 1], [], []>} : vector<8x8xbf16>, vector<8x8xbf16>, vector<8x8xf32> -> vector<8x8xf32>
    %85 = arith.truncf %84 : vector<8x8xf32> to vector<8x8xbf16>
    %86 = arith.index_cast %12 : i32 to index
    %c16_25 = arith.constant 16 : index
    %87 = vector.load %arg9[%86, %c16_25] : memref<16x32xbf16, #tpu.memory_space<vmem>>, vector<8x8xbf16>
    tpu.vector_store %arg9[%86, %c16_25], %85 {strides = array<i32>} : memref<16x32xbf16, #tpu.memory_space<vmem>>, vector<8x8xbf16>,
    %88 = arith.index_cast %12 : i32 to index
    %c24 = arith.constant 24 : index
    %89 = vector.load %arg8[%88, %c24] : memref<16x96xbf16, #tpu.memory_space<vmem>>, vector<8x8xbf16>
    %90 = arith.index_cast %12 : i32 to index
    %c56 = arith.constant 56 : index
    %91 = vector.load %arg8[%90, %c56] : memref<16x96xbf16, #tpu.memory_space<vmem>>, vector<8x8xbf16>
    %92 = arith.index_cast %12 : i32 to index
    %c88 = arith.constant 88 : index
    %93 = vector.load %arg8[%92, %c88] : memref<16x96xbf16, #tpu.memory_space<vmem>>, vector<8x8xbf16>
    %cst_26 = arith.constant dense<0.000000e+00> : vector<8x8xf32>
    %94 = tpu.matmul %89, %91, %cst_26 {dimension_numbers = #tpu.dot_dimension_numbers<[1], [1], [0], [0], [0, 0, 1, 0], [], []>} : vector<8x8xbf16>, vector<8x8xbf16>, vector<8x8xf32> -> vector<8x8xf32>
    %95 = vector.broadcast %15 : vector<1x8xf32> to vector<8x8xf32>
    %96 = arith.addf %94, %95 : vector<8x8xf32>
    %cst_27 = arith.constant dense<0xFF800000> : vector<8xf32>
    %97 = vector.multi_reduction <maximumf>, %96, %cst_27 [1] : vector<8x8xf32> to vector<8xf32>
    %98 = vector.shape_cast %97 : vector<8xf32> to vector<8x1xf32>
    %99 = vector.broadcast %98 : vector<8x1xf32> to vector<8x8xf32>
    %100 = arith.subf %96, %99 : vector<8x8xf32>
    %101 = math.exp %100 : vector<8x8xf32>
    %cst_28 = arith.constant dense<0.000000e+00> : vector<8xf32>
    %102 = vector.multi_reduction <add>, %101, %cst_28 [1] : vector<8x8xf32> to vector<8xf32>
    %103 = vector.shape_cast %102 : vector<8xf32> to vector<8x1xf32>
    %104 = tpu.reciprocal %103 {approx = true} : vector<8x1xf32> -> vector<8x1xf32>
    %105 = vector.broadcast %104 : vector<8x1xf32> to vector<8x8xf32>
    %106 = arith.mulf %101, %105 : vector<8x8xf32>
    %107 = arith.truncf %106 : vector<8x8xf32> to vector<8x8xbf16>
    %cst_29 = arith.constant dense<0.000000e+00> : vector<8x8xf32>
    %108 = tpu.matmul %107, %93, %cst_29 {dimension_numbers = #tpu.dot_dimension_numbers<[1], [0], [0], [1], [0, 0, 1, 1], [], []>} : vector<8x8xbf16>, vector<8x8xbf16>, vector<8x8xf32> -> vector<8x8xf32>
    %109 = arith.truncf %108 : vector<8x8xf32> to vector<8x8xbf16>
    %110 = arith.index_cast %12 : i32 to index
    %c24_30 = arith.constant 24 : index
    %111 = vector.load %arg9[%110, %c24_30] : memref<16x32xbf16, #tpu.memory_space<vmem>>, vector<8x8xbf16>
    tpu.vector_store %arg9[%110, %c24_30], %109 {strides = array<i32>} : memref<16x32xbf16, #tpu.memory_space<vmem>>, vector<8x8xbf16>,
    %c1_i32 = arith.constant 1 : i32
    %c8_i32_31 = arith.constant 8 : i32
    %112 = arith.muli %c1_i32, %c8_i32_31 : i32
    %113 = tpu.assume_multiple %112, 8 : i32
    %114 = arith.index_cast %c1_i32 : i32 to index
    %c0_32 = arith.constant 0 : index
    %c0_33 = arith.constant 0 : index
    %115 = vector.load %arg2[%114, %c0_32, %c0_33] : memref<2x1x8xf32, #tpu.memory_space<vmem>>, vector<1x1x8xf32>
    %116 = vector.shape_cast %115 : vector<1x1x8xf32> to vector<1x8xf32>
    %117 = arith.index_cast %113 : i32 to index
    %c0_34 = arith.constant 0 : index
    %118 = vector.load %arg8[%117, %c0_34] : memref<16x96xbf16, #tpu.memory_space<vmem>>, vector<8x8xbf16>
    %119 = arith.index_cast %113 : i32 to index
    %c32_35 = arith.constant 32 : index
    %120 = vector.load %arg8[%119, %c32_35] : memref<16x96xbf16, #tpu.memory_space<vmem>>, vector<8x8xbf16>
    %121 = arith.index_cast %113 : i32 to index
    %c64_36 = arith.constant 64 : index
    %122 = vector.load %arg8[%121, %c64_36] : memref<16x96xbf16, #tpu.memory_space<vmem>>, vector<8x8xbf16>
    %cst_37 = arith.constant dense<0.000000e+00> : vector<8x8xf32>
    %123 = tpu.matmul %118, %120, %cst_37 {dimension_numbers = #tpu.dot_dimension_numbers<[1], [1], [0], [0], [0, 0, 1, 0], [], []>} : vector<8x8xbf16>, vector<8x8xbf16>, vector<8x8xf32> -> vector<8x8xf32>
    %124 = vector.broadcast %116 : vector<1x8xf32> to vector<8x8xf32>
    %125 = arith.addf %123, %124 : vector<8x8xf32>
    %cst_38 = arith.constant dense<0xFF800000> : vector<8xf32>
    %126 = vector.multi_reduction <maximumf>, %125, %cst_38 [1] : vector<8x8xf32> to vector<8xf32>
    %127 = vector.shape_cast %126 : vector<8xf32> to vector<8x1xf32>
    %128 = vector.broadcast %127 : vector<8x1xf32> to vector<8x8xf32>
    %129 = arith.subf %125, %128 : vector<8x8xf32>
    %130 = math.exp %129 : vector<8x8xf32>
    %cst_39 = arith.constant dense<0.000000e+00> : vector<8xf32>
    %131 = vector.multi_reduction <add>, %130, %cst_39 [1] : vector<8x8xf32> to vector<8xf32>
    %132 = vector.shape_cast %131 : vector<8xf32> to vector<8x1xf32>
    %133 = tpu.reciprocal %132 {approx = true} : vector<8x1xf32> -> vector<8x1xf32>
    %134 = vector.broadcast %133 : vector<8x1xf32> to vector<8x8xf32>
    %135 = arith.mulf %130, %134 : vector<8x8xf32>
    %136 = arith.truncf %135 : vector<8x8xf32> to vector<8x8xbf16>
    %cst_40 = arith.constant dense<0.000000e+00> : vector<8x8xf32>
    %137 = tpu.matmul %136, %122, %cst_40 {dimension_numbers = #tpu.dot_dimension_numbers<[1], [0], [0], [1], [0, 0, 1, 1], [], []>} : vector<8x8xbf16>, vector<8x8xbf16>, vector<8x8xf32> -> vector<8x8xf32>
    %138 = arith.truncf %137 : vector<8x8xf32> to vector<8x8xbf16>
    %139 = arith.index_cast %113 : i32 to index
    %c0_41 = arith.constant 0 : index
    %140 = vector.load %arg9[%139, %c0_41] : memref<16x32xbf16, #tpu.memory_space<vmem>>, vector<8x8xbf16>
    tpu.vector_store %arg9[%139, %c0_41], %138 {strides = array<i32>} : memref<16x32xbf16, #tpu.memory_space<vmem>>, vector<8x8xbf16>,
    %141 = arith.index_cast %113 : i32 to index
    %c8_42 = arith.constant 8 : index
    %142 = vector.load %arg8[%141, %c8_42] : memref<16x96xbf16, #tpu.memory_space<vmem>>, vector<8x8xbf16>
    %143 = arith.index_cast %113 : i32 to index
    %c40_43 = arith.constant 40 : index
    %144 = vector.load %arg8[%143, %c40_43] : memref<16x96xbf16, #tpu.memory_space<vmem>>, vector<8x8xbf16>
    %145 = arith.index_cast %113 : i32 to index
    %c72_44 = arith.constant 72 : index
    %146 = vector.load %arg8[%145, %c72_44] : memref<16x96xbf16, #tpu.memory_space<vmem>>, vector<8x8xbf16>
    %cst_45 = arith.constant dense<0.000000e+00> : vector<8x8xf32>
    %147 = tpu.matmul %142, %144, %cst_45 {dimension_numbers = #tpu.dot_dimension_numbers<[1], [1], [0], [0], [0, 0, 1, 0], [], []>} : vector<8x8xbf16>, vector<8x8xbf16>, vector<8x8xf32> -> vector<8x8xf32>
    %148 = vector.broadcast %116 : vector<1x8xf32> to vector<8x8xf32>
    %149 = arith.addf %147, %148 : vector<8x8xf32>
    %cst_46 = arith.constant dense<0xFF800000> : vector<8xf32>
    %150 = vector.multi_reduction <maximumf>, %149, %cst_46 [1] : vector<8x8xf32> to vector<8xf32>
    %151 = vector.shape_cast %150 : vector<8xf32> to vector<8x1xf32>
    %152 = vector.broadcast %151 : vector<8x1xf32> to vector<8x8xf32>
    %153 = arith.subf %149, %152 : vector<8x8xf32>
    %154 = math.exp %153 : vector<8x8xf32>
    %cst_47 = arith.constant dense<0.000000e+00> : vector<8xf32>
    %155 = vector.multi_reduction <add>, %154, %cst_47 [1] : vector<8x8xf32> to vector<8xf32>
    %156 = vector.shape_cast %155 : vector<8xf32> to vector<8x1xf32>
    %157 = tpu.reciprocal %156 {approx = true} : vector<8x1xf32> -> vector<8x1xf32>
    %158 = vector.broadcast %157 : vector<8x1xf32> to vector<8x8xf32>
    %159 = arith.mulf %154, %158 : vector<8x8xf32>
    %160 = arith.truncf %159 : vector<8x8xf32> to vector<8x8xbf16>
    %cst_48 = arith.constant dense<0.000000e+00> : vector<8x8xf32>
    %161 = tpu.matmul %160, %146, %cst_48 {dimension_numbers = #tpu.dot_dimension_numbers<[1], [0], [0], [1], [0, 0, 1, 1], [], []>} : vector<8x8xbf16>, vector<8x8xbf16>, vector<8x8xf32> -> vector<8x8xf32>
    %162 = arith.truncf %161 : vector<8x8xf32> to vector<8x8xbf16>
    %163 = arith.index_cast %113 : i32 to index
    %c8_49 = arith.constant 8 : index
    %164 = vector.load %arg9[%163, %c8_49] : memref<16x32xbf16, #tpu.memory_space<vmem>>, vector<8x8xbf16>
    tpu.vector_store %arg9[%163, %c8_49], %162 {strides = array<i32>} : memref<16x32xbf16, #tpu.memory_space<vmem>>, vector<8x8xbf16>,
    %165 = arith.index_cast %113 : i32 to index
    %c16_50 = arith.constant 16 : index
    %166 = vector.load %arg8[%165, %c16_50] : memref<16x96xbf16, #tpu.memory_space<vmem>>, vector<8x8xbf16>
    %167 = arith.index_cast %113 : i32 to index
    %c48_51 = arith.constant 48 : index
    %168 = vector.load %arg8[%167, %c48_51] : memref<16x96xbf16, #tpu.memory_space<vmem>>, vector<8x8xbf16>
    %169 = arith.index_cast %113 : i32 to index
    %c80_52 = arith.constant 80 : index
    %170 = vector.load %arg8[%169, %c80_52] : memref<16x96xbf16, #tpu.memory_space<vmem>>, vector<8x8xbf16>
    %cst_53 = arith.constant dense<0.000000e+00> : vector<8x8xf32>
    %171 = tpu.matmul %166, %168, %cst_53 {dimension_numbers = #tpu.dot_dimension_numbers<[1], [1], [0], [0], [0, 0, 1, 0], [], []>} : vector<8x8xbf16>, vector<8x8xbf16>, vector<8x8xf32> -> vector<8x8xf32>
    %172 = vector.broadcast %116 : vector<1x8xf32> to vector<8x8xf32>
    %173 = arith.addf %171, %172 : vector<8x8xf32>
    %cst_54 = arith.constant dense<0xFF800000> : vector<8xf32>
    %174 = vector.multi_reduction <maximumf>, %173, %cst_54 [1] : vector<8x8xf32> to vector<8xf32>
    %175 = vector.shape_cast %174 : vector<8xf32> to vector<8x1xf32>
    %176 = vector.broadcast %175 : vector<8x1xf32> to vector<8x8xf32>
    %177 = arith.subf %173, %176 : vector<8x8xf32>
    %178 = math.exp %177 : vector<8x8xf32>
    %cst_55 = arith.constant dense<0.000000e+00> : vector<8xf32>
    %179 = vector.multi_reduction <add>, %178, %cst_55 [1] : vector<8x8xf32> to vector<8xf32>
    %180 = vector.shape_cast %179 : vector<8xf32> to vector<8x1xf32>
    %181 = tpu.reciprocal %180 {approx = true} : vector<8x1xf32> -> vector<8x1xf32>
    %182 = vector.broadcast %181 : vector<8x1xf32> to vector<8x8xf32>
    %183 = arith.mulf %178, %182 : vector<8x8xf32>
    %184 = arith.truncf %183 : vector<8x8xf32> to vector<8x8xbf16>
    %cst_56 = arith.constant dense<0.000000e+00> : vector<8x8xf32>
    %185 = tpu.matmul %184, %170, %cst_56 {dimension_numbers = #tpu.dot_dimension_numbers<[1], [0], [0], [1], [0, 0, 1, 1], [], []>} : vector<8x8xbf16>, vector<8x8xbf16>, vector<8x8xf32> -> vector<8x8xf32>
    %186 = arith.truncf %185 : vector<8x8xf32> to vector<8x8xbf16>
    %187 = arith.index_cast %113 : i32 to index
    %c16_57 = arith.constant 16 : index
    %188 = vector.load %arg9[%187, %c16_57] : memref<16x32xbf16, #tpu.memory_space<vmem>>, vector<8x8xbf16>
    tpu.vector_store %arg9[%187, %c16_57], %186 {strides = array<i32>} : memref<16x32xbf16, #tpu.memory_space<vmem>>, vector<8x8xbf16>,
    %189 = arith.index_cast %113 : i32 to index
    %c24_58 = arith.constant 24 : index
    %190 = vector.load %arg8[%189, %c24_58] : memref<16x96xbf16, #tpu.memory_space<vmem>>, vector<8x8xbf16>
    %191 = arith.index_cast %113 : i32 to index
    %c56_59 = arith.constant 56 : index
    %192 = vector.load %arg8[%191, %c56_59] : memref<16x96xbf16, #tpu.memory_space<vmem>>, vector<8x8xbf16>
    %193 = arith.index_cast %113 : i32 to index
    %c88_60 = arith.constant 88 : index
    %194 = vector.load %arg8[%193, %c88_60] : memref<16x96xbf16, #tpu.memory_space<vmem>>, vector<8x8xbf16>
    %cst_61 = arith.constant dense<0.000000e+00> : vector<8x8xf32>
    %195 = tpu.matmul %190, %192, %cst_61 {dimension_numbers = #tpu.dot_dimension_numbers<[1], [1], [0], [0], [0, 0, 1, 0], [], []>} : vector<8x8xbf16>, vector<8x8xbf16>, vector<8x8xf32> -> vector<8x8xf32>
    %196 = vector.broadcast %116 : vector<1x8xf32> to vector<8x8xf32>
    %197 = arith.addf %195, %196 : vector<8x8xf32>
    %cst_62 = arith.constant dense<0xFF800000> : vector<8xf32>
    %198 = vector.multi_reduction <maximumf>, %197, %cst_62 [1] : vector<8x8xf32> to vector<8xf32>
    %199 = vector.shape_cast %198 : vector<8xf32> to vector<8x1xf32>
    %200 = vector.broadcast %199 : vector<8x1xf32> to vector<8x8xf32>
    %201 = arith.subf %197, %200 : vector<8x8xf32>
    %202 = math.exp %201 : vector<8x8xf32>
    %cst_63 = arith.constant dense<0.000000e+00> : vector<8xf32>
    %203 = vector.multi_reduction <add>, %202, %cst_63 [1] : vector<8x8xf32> to vector<8xf32>
    %204 = vector.shape_cast %203 : vector<8xf32> to vector<8x1xf32>
    %205 = tpu.reciprocal %204 {approx = true} : vector<8x1xf32> -> vector<8x1xf32>
    %206 = vector.broadcast %205 : vector<8x1xf32> to vector<8x8xf32>
    %207 = arith.mulf %202, %206 : vector<8x8xf32>
    %208 = arith.truncf %207 : vector<8x8xf32> to vector<8x8xbf16>
    %cst_64 = arith.constant dense<0.000000e+00> : vector<8x8xf32>
    %209 = tpu.matmul %208, %194, %cst_64 {dimension_numbers = #tpu.dot_dimension_numbers<[1], [0], [0], [1], [0, 0, 1, 1], [], []>} : vector<8x8xbf16>, vector<8x8xbf16>, vector<8x8xf32> -> vector<8x8xf32>
    %210 = arith.truncf %209 : vector<8x8xf32> to vector<8x8xbf16>
    %211 = arith.index_cast %113 : i32 to index
    %c24_65 = arith.constant 24 : index
    %212 = vector.load %arg9[%211, %c24_65] : memref<16x32xbf16, #tpu.memory_space<vmem>>, vector<8x8xbf16>
    tpu.vector_store %arg9[%211, %c24_65], %210 {strides = array<i32>} : memref<16x32xbf16, #tpu.memory_space<vmem>>, vector<8x8xbf16>,
    %c2_i32 = arith.constant 2 : i32
    %c0_66 = arith.constant 0 : index
    %c0_67 = arith.constant 0 : index
    %213 = vector.load %arg9[%c0_66, %c0_67] : memref<16x32xbf16, #tpu.memory_space<vmem>>, vector<16x32xbf16>
    %c0_68 = arith.constant 0 : index
    %c0_69 = arith.constant 0 : index
    %214 = vector.load %arg5[%c0_68, %c0_69] : memref<32x32xbf16, #tpu.memory_space<vmem>>, vector<32x32xbf16>
    %cst_70 = arith.constant dense<0.000000e+00> : vector<16x32xf32>
    %215 = tpu.matmul %213, %214, %cst_70 {dimension_numbers = #tpu.dot_dimension_numbers<[1], [0], [0], [1], [0, 0, 1, 1], [], []>} : vector<16x32xbf16>, vector<32x32xbf16>, vector<16x32xf32> -> vector<16x32xf32>
    %c0_71 = arith.constant 0 : index
    %c0_72 = arith.constant 0 : index
    %216 = vector.load %arg6[%c0_71, %c0_72] : memref<1x32xf32, #tpu.memory_space<vmem>>, vector<1x32xf32>
    %217 = vector.shape_cast %216 : vector<1x32xf32> to vector<32xf32>
    %218 = vector.shape_cast %217 : vector<32xf32> to vector<1x32xf32>
    %219 = vector.broadcast %218 : vector<1x32xf32> to vector<16x32xf32>
    %220 = arith.addf %215, %219 : vector<16x32xf32>
    %221 = vector.shape_cast %220 : vector<16x32xf32> to vector<2x8x32xf32>
    %c0_73 = arith.constant 0 : index
    %c0_74 = arith.constant 0 : index
    %c0_75 = arith.constant 0 : index
    %222 = vector.load %arg7[%c0_73, %c0_74, %c0_75] : memref<2x8x32xf32, #tpu.memory_space<vmem>>, vector<2x8x32xf32>
    tpu.vector_store %arg7[%c0_73, %c0_74, %c0_75], %221 {strides = array<i32>} : memref<2x8x32xf32, #tpu.memory_space<vmem>>, vector<2x8x32xf32>,
    return
  }
  func.func @transform_0(%arg0: i32) -> (i32, i32, i32) {
    %c0_i32 = arith.constant 0 : i32
    %c0_i32_0 = arith.constant 0 : i32
    %c0_i32_1 = arith.constant 0 : i32
    return %arg0, %c0_i32, %c0_i32_0 : i32, i32, i32
  }
  func.func @transform_1(%arg0: i32) -> (i32, i32, i32) {
    %c0_i32 = arith.constant 0 : i32
    %c0_i32_0 = arith.constant 0 : i32
    %c0_i32_1 = arith.constant 0 : i32
    return %arg0, %c0_i32, %c0_i32_0 : i32, i32, i32
  }
  func.func @transform_2(%arg0: i32) -> (i32, i32) {
    %c0_i32 = arith.constant 0 : i32
    %c0_i32_0 = arith.constant 0 : i32
    %c0_i32_1 = arith.constant 0 : i32
    return %c0_i32, %c0_i32_0 : i32, i32
  }
  func.func @transform_3(%arg0: i32) -> (i32, i32) {
    %c0_i32 = arith.constant 0 : i32
    %c0_i32_0 = arith.constant 0 : i32
    %c0_i32_1 = arith.constant 0 : i32
    return %c0_i32, %c0_i32_0 : i32, i32
  }
  func.func @transform_4(%arg0: i32) -> (i32, i32) {
    %c0_i32 = arith.constant 0 : i32
    %c0_i32_0 = arith.constant 0 : i32
    %c0_i32_1 = arith.constant 0 : i32
    return %c0_i32, %c0_i32_0 : i32, i32
  }
  func.func @transform_5(%arg0: i32) -> (i32, i32) {
    %c0_i32 = arith.constant 0 : i32
    %c0_i32_0 = arith.constant 0 : i32
    %c0_i32_1 = arith.constant 0 : i32
    return %c0_i32, %c0_i32_0 : i32, i32
  }
  func.func @transform_6(%arg0: i32) -> (i32, i32, i32) {
    %c0_i32 = arith.constant 0 : i32
    %c0_i32_0 = arith.constant 0 : i32
    %c0_i32_1 = arith.constant 0 : i32
    return %arg0, %c0_i32, %c0_i32_0 : i32, i32, i32
  }
}

</mosaic_0001>

<llo_original>
// kernel: tpu_custom_call.1
$region0: #{tpu_custom_call.1}
  #allocation0 [shape = 'u32[]', space=smem, size = 0x4, offset = 0x4, fixed_abs, tag = 'smem constant byte address 0x4 - core index']
  #allocation1 [shape = 'u32[72,128]{1,0:T(1,128)}', space=vmem, size = 0x9000, scoped, tag = 'internal scratch']
  #allocation2 [shape = 'bf16[16,96]{1,0:T(8,128)(2,1)}', space=vmem, size = 0x1000, scoped, tag = 'scratch operand']
  #allocation3 [shape = 'bf16[16,32]{1,0:T(8,128)(2,1)}', space=vmem, size = 0x1000, scoped, tag = 'scratch operand']
  %s0 = inlined_call_operand.hbm [shape: bf16[2,8,32], index: 0, kind: input, shape index: {}]
  %s1 = inlined_call_operand.hbm [shape: f32[2,1,8], index: 1, kind: input, shape index: {}]
  %s2 = inlined_call_operand.hbm [shape: bf16[32,96], index: 2, kind: input, shape index: {}]
  %s3 = inlined_call_operand.vmem [shape: f32[1,96], index: 3, kind: input, shape index: {}]
  %s4 = inlined_call_operand.hbm [shape: bf16[32,32], index: 4, kind: input, shape index: {}]
  %s5 = inlined_call_operand.vmem [shape: f32[1,32], index: 5, kind: input, shape index: {}]
  %s6 = inlined_call_operand.hbm [shape: f32[2,8,32], index: 6, kind: output, shape index: {}]
  %s7 = sld [smem:[#allocation0]]
  $region50: #{tpu_custom_call.1} parent=0
    _
  %s9 = ssub.s32 1, %s7
  %s10 = scalar_select 0, %s9, %s7
  $region1: #{tpu_custom_call.1} parent=0
    #allocation4 [shape = 'u8[4096]{0}', space=vmem, size = 0x1000, scoped, tag = 'input window, operand 0, single buffered']
    #allocation5 [shape = 's32[1]{0}', space=sflag, size = 0x4, scoped, tag = 'scoped memory for tpu_custom_call.1']
    #allocation6 [shape = 's32[1]{0}', space=sflag, size = 0x4, scoped, tag = 'scoped memory for tpu_custom_call.1']
    #allocation7 [shape = 'u8[1024]{0}', space=vmem, size = 0x400, scoped, tag = 'input window, operand 1, single buffered']
    #allocation8 [shape = 's32[1]{0}', space=sflag, size = 0x4, scoped, tag = 'scoped memory for tpu_custom_call.1']
    #allocation9 [shape = 'u8[8192]{0}', space=vmem, size = 0x2000, scoped, tag = 'input window, operand 2, single buffered']
    #allocation10 [shape = 'u8[8192]{0}', space=vmem, size = 0x2000, scoped, tag = 'input window, operand 4, single buffered']
    #allocation11 [shape = 's32[1]{0}', space=sflag, size = 0x4, scoped, tag = 'scoped memory for tpu_custom_call.1']
    #allocation12 [shape = 'u8[8192]{0}', space=vmem, size = 0x2000, scoped, tag = 'output window, operand 0, single buffered']
    %11 = vsyncpa [#allocation5], 0
    %12 = vsyncpa [#allocation8], 0
    %13 = vsyncpa [#allocation11], 0
    %14 = vsyncpa [#allocation6], 0
    // Predicated region
    $region2: #{tpu_custom_call.1} parent=1 // pred_check
      _
    $region3: #{tpu_custom_call.1} parent=1 // pred_check_branch
      %16 = sbr.rel (0) target = $region5
    $region4: #{tpu_custom_call.1} parent=1 // pred_region
      %18 = vsyncadd [#allocation5], 0
      %s19 = sshll.u32 %s0, 4
      %s20 = int_to_ptr.hbm [resolvable:$true] %s19
      %s21 = sshll.u32 [#allocation4], 4
      %s22 = int_to_ptr.vmem [resolvable:$true] %s21
      %27 = dma.hbm_to_vmem [thread:$0]  %s20, 128, %s22, [#allocation5], 64, 64, 4
    $region5: #{tpu_custom_call.1} parent=1 // pred_fallthru
      _
    // Predicated region
    $region6: #{tpu_custom_call.1} parent=1 // pred_check
      _
    $region7: #{tpu_custom_call.1} parent=1 // pred_check_branch
      %29 = sbr.rel (0) target = $region9
    $region8: #{tpu_custom_call.1} parent=1 // pred_region
      %31 = vsyncadd [#allocation8], 0
      %s32 = sshll.u32 %s1, 4
      %s33 = int_to_ptr.hbm [resolvable:$true] %s32
      %s34 = sshll.u32 [#allocation7], 4
      %s35 = int_to_ptr.vmem [resolvable:$true] %s34
      %40 = dma.hbm_to_vmem [thread:$0]  %s33, 32, %s35, [#allocation8], 16, 16, 1
    $region9: #{tpu_custom_call.1} parent=1 // pred_fallthru
      _
    // Predicated region
    $region10: #{tpu_custom_call.1} parent=1 // pred_check
      _
    $region11: #{tpu_custom_call.1} parent=1 // pred_check_branch
      %42 = sbr.rel (0) target = $region13
    $region12: #{tpu_custom_call.1} parent=1 // pred_region
      %44 = vsyncadd [#allocation8], 0
      %s45 = sshll.u32 %s2, 4
      %s46 = int_to_ptr.hbm [resolvable:$true] %s45
      %s47 = sshll.u32 [#allocation9], 4
      %s48 = int_to_ptr.vmem [resolvable:$true] %s47
      %53 = dma.hbm_to_vmem [thread:$0]  %s46, 256, %s48, [#allocation8], 64, 64, 4
    $region13: #{tpu_custom_call.1} parent=1 // pred_fallthru
      _
    // Predicated region
    $region14: #{tpu_custom_call.1} parent=1 // pred_check
      _
    $region15: #{tpu_custom_call.1} parent=1 // pred_check_branch
      %55 = sbr.rel (0) target = $region17
    $region16: #{tpu_custom_call.1} parent=1 // pred_region
      _
    $region17: #{tpu_custom_call.1} parent=1 // pred_fallthru
      _
    // Predicated region
    $region18: #{tpu_custom_call.1} parent=1 // pred_check
      _
    $region19: #{tpu_custom_call.1} parent=1 // pred_check_branch
      %57 = sbr.rel (0) target = $region21
    $region20: #{tpu_custom_call.1} parent=1 // pred_region
      %59 = vsyncadd [#allocation11], 0
      %s60 = sshll.u32 %s4, 4
      %s61 = int_to_ptr.hbm [resolvable:$true] %s60
      %s62 = sshll.u32 [#allocation10], 4
      %s63 = int_to_ptr.vmem [resolvable:$true] %s62
      %68 = dma.hbm_to_vmem [thread:$0]  %s61, 256, %s63, [#allocation11], 64, 64, 4
    $region21: #{tpu_custom_call.1} parent=1 // pred_fallthru
      _
    // Predicated region
    $region22: #{tpu_custom_call.1} parent=1 // pred_check
      _
    $region23: #{tpu_custom_call.1} parent=1 // pred_check_branch
      %70 = sbr.rel (0) target = $region25
    $region24: #{tpu_custom_call.1} parent=1 // pred_region
      _
    $region25: #{tpu_custom_call.1} parent=1 // pred_fallthru
      _
    // Predicated region
    $region26: #{tpu_custom_call.1} parent=1 // pred_check
      _
    $region27: #{tpu_custom_call.1} parent=1 // pred_check_branch
      %72 = sbr.rel (0) target = $region29
    $region28: #{tpu_custom_call.1} parent=1 // pred_region
      %74 = dma.done [#allocation5], 128
    $region29: #{tpu_custom_call.1} parent=1 // pred_fallthru
      _
    // Predicated region
    $region30: #{tpu_custom_call.1} parent=1 // pred_check
      _
    $region31: #{tpu_custom_call.1} parent=1 // pred_check_branch
      %76 = sbr.rel (0) target = $region33
    $region32: #{tpu_custom_call.1} parent=1 // pred_region
      %78 = dma.done [#allocation8], 32
    $region33: #{tpu_custom_call.1} parent=1 // pred_fallthru
      _
    // Predicated region
    $region34: #{tpu_custom_call.1} parent=1 // pred_check
      _
    $region35: #{tpu_custom_call.1} parent=1 // pred_check_branch
      %80 = sbr.rel (0) target = $region37
    $region36: #{tpu_custom_call.1} parent=1 // pred_region
      %82 = dma.done [#allocation8], 256
    $region37: #{tpu_custom_call.1} parent=1 // pred_fallthru
      _
    // Predicated region
    $region38: #{tpu_custom_call.1} parent=1 // pred_check
      _
    $region39: #{tpu_custom_call.1} parent=1 // pred_check_branch
      %84 = sbr.rel (0) target = $region41
    $region40: #{tpu_custom_call.1} parent=1 // pred_region
      %86 = dma.done [#allocation11], 256
    $region41: #{tpu_custom_call.1} parent=1 // pred_fallthru
      _
    %v88 = vld [vmem:[#allocation4] sm:$0xf]
    %v89 = vld [vmem:[#allocation4 + $0x4] sm:$0xf]
    %v90 = vld [vmem:[#allocation9] sm:$0xf]
    %v91 = vld [vmem:[#allocation9 + $0x4] sm:$0xf]
    %v92 = vld [vmem:[#allocation9 + $0x8] sm:$0xf]
    %v93 = vld [vmem:[#allocation9 + $0xc] sm:$0xf]
    %v94 = vld [vmem:[%s3] sm:$0x1]
    %v96 = vperm.slane %v94, 0
    %v100 = vunpack.c.l.b16 %v88
    %v101 = vunpack.c.l.b16 %v89
    %v102 = vpack.c.b16 %v101, %v100
    %v107 = vunpack.c.l.b16 %v90
    %v108 = vunpack.c.l.b16 %v91
    %v109 = vunpack.c.l.b16 %v92
    %v110 = vunpack.c.l.b16 %v93
    %v111 = vpack.c.b16 %v108, %v107
    %v112 = vpack.c.b16 %v110, %v109
    %vm115 = vcmask 261120
    %v117 = vsel %vm115, %v102, 0
    %119 = vmatpush.bf16.msra.mxu0 0
    %120 = vmatpush.bf16.msra.mxu0 0
    %121 = vmatpush.bf16.msra.mxu0 0
    %122 = vmatpush.bf16.msra.mxu0 0
    %123 = vmatpush.bf16.msra.mxu0 0
    %124 = vmatpush.bf16.msra.mxu0 0
    %125 = vmatpush.bf16.msra.mxu0 %v112
    %126 = vmatpush.bf16.msra.mxu0 %v111
    %127 = vmatmul.bf16.gmra.mxu0 %v117
    %v128 = vpop.f32.mrf.mxu0
    %v129 = vadd.f32 %v96, %v128
    %v130 = vpop.f32.mrf.mxu0
    %v131 = vadd.f32 %v96, %v130
    %132 = vdwg.mxu0
    %v133 = vpack.c.bf16 %v129, %v129
    %v134 = vpack.c.bf16 %v131, %v131
    %vm135 = vcmask 781312
    %136 = vst.msk [vmem:[#allocation2] sm:$0xf] %vm135, %v133
    %137 = vst.msk [vmem:[#allocation2 + $0x4] sm:$0xf] %vm135, %v134
    %v138 = vld [vmem:[#allocation7] sm:$0x1]
    %v139 = vld [vmem:[#allocation2] sm:$0xf]
    %v141 = vperm.slane %v138, 0
    %v144 = vunpack.c.l.b16 %v139
    %v145 = vpack.c.b16 %v144, %v144
    %146 = vrot.lane.b32.xlu0 %v145, 96
    %v147 = vpop.permute.xlu0 %146
    %vm148 = vcmask 64512
    %v150 = vsel %vm148, %v139, 0
    %v153 = vsel %vm148, %v147, 0
    %155 = vmatpush.bf16.xpose.msra.mxu0 0
    %156 = vmatpush.bf16.xpose.msra.mxu0 0
    %157 = vmatpush.bf16.xpose.msra.mxu0 0
    %158 = vmatpush.bf16.xpose.msra.mxu0 0
    %159 = vmatpush.bf16.xpose.msra.mxu0 0
    %160 = vmatpush.bf16.xpose.msra.mxu0 0
    %161 = vmatpush.bf16.xpose.msra.mxu0 0
    %162 = vmatpush.bf16.xpose.msra.mxu0 %v153
    %163 = vmatmul.bf16.gmra.mxu0 %v150
    %v164 = vpop.f32.mrf.mxu0
    %v165 = vadd.f32 %v141, %v164
    %v166 = vpop.f32.mrf.mxu0
    %167 = vdwg.mxu0
    %v168 = vsel %vm148, %v165, -inf
    %169 = vmax.xlane.f32.xlu0 %v168
    %v170 = vpop.xlane.xlu0 %169
    %v171 = vsub.f32 %v165, %v170
    %v172 = vmul.f32 %v171, 1.442695
    %v173 = vpow.pop %v172
    %v174 = vsel %vm148, %v173, 0.0
    %175 = vadd.xlane.f32.xlu0 %v174
    %v176 = vpop.xlane.xlu0 %175
    %v177 = vrcp.pop %v176
    %v178 = vmul.f32 %v173, %v177
    %v179 = vpack.c.bf16 %v178, %v178
    %180 = vrot.lane.b32.xlu0 %v145, 64
    %v181 = vpop.permute.xlu0 %180
    %v183 = vsel %vm148, %v179, 0
    %vm185 = vcmask 1043456
    %v187 = vsel %vm185, %v181, 0
    %189 = vmatpush.bf16.msra.mxu0 0
    %190 = vmatpush.bf16.msra.mxu0 0
    %191 = vmatpush.bf16.msra.mxu0 0
    %192 = vmatpush.bf16.msra.mxu0 0
    %193 = vmatpush.bf16.msra.mxu0 0
    %194 = vmatpush.bf16.msra.mxu0 0
    %195 = vmatpush.bf16.msra.mxu0 0
    %196 = vmatpush.bf16.msra.mxu0 %v187
    %197 = vmatmul.bf16.gmra.mxu0 %v183
    %v198 = vpop.f32.mrf.mxu0
    %v199 = vadd.f32 0.0, %v198
    %v200 = vpop.f32.mrf.mxu0
    %201 = vdwg.mxu0
    %v202 = vpack.c.bf16 %v199, %v199
    %vm203 = vcmask 60416
    %204 = vst.msk [vmem:[#allocation3] sm:$0xf] %vm203, %v202
    %v205 = vld [vmem:[#allocation2] sm:$0xf]
    %v207 = vunpack.c.l.b16 %v205
    %v208 = vpack.c.b16 %v207, %v207
    %209 = vrot.lane.b32.xlu0 %v208, 120
    %v210 = vpop.permute.xlu0 %209
    %211 = vrot.lane.b32.xlu0 %v208, 88
    %v212 = vpop.permute.xlu0 %211
    %v214 = vsel %vm148, %v210, 0
    %v217 = vsel %vm148, %v212, 0
    %219 = vmatpush.bf16.xpose.msra.mxu0 0
    %220 = vmatpush.bf16.xpose.msra.mxu0 0
    %221 = vmatpush.bf16.xpose.msra.mxu0 0
    %222 = vmatpush.bf16.xpose.msra.mxu0 0
    %223 = vmatpush.bf16.xpose.msra.mxu0 0
    %224 = vmatpush.bf16.xpose.msra.mxu0 0
    %225 = vmatpush.bf16.xpose.msra.mxu0 0
    %226 = vmatpush.bf16.xpose.msra.mxu0 %v217
    %227 = vmatmul.bf16.gmra.mxu0 %v214
    %v228 = vpop.f32.mrf.mxu0
    %v229 = vadd.f32 %v141, %v228
    %v230 = vpop.f32.mrf.mxu0
    %231 = vdwg.mxu0
    %v232 = vsel %vm148, %v229, -inf
    %233 = vmax.xlane.f32.xlu0 %v232
    %v234 = vpop.xlane.xlu0 %233
    %v235 = vsub.f32 %v229, %v234
    %v236 = vmul.f32 %v235, 1.442695
    %v237 = vpow.pop %v236
    %v238 = vsel %vm148, %v237, 0.0
    %239 = vadd.xlane.f32.xlu0 %v238
    %v240 = vpop.xlane.xlu0 %239
    %v241 = vrcp.pop %v240
    %v242 = vmul.f32 %v237, %v241
    %v243 = vpack.c.bf16 %v242, %v242
    %244 = vrot.lane.b32.xlu0 %v208, 56
    %v245 = vpop.permute.xlu0 %244
    %v247 = vsel %vm148, %v243, 0
    %v250 = vsel %vm185, %v245, 0
    %252 = vmatpush.bf16.msra.mxu0 0
    %253 = vmatpush.bf16.msra.mxu0 0
    %254 = vmatpush.bf16.msra.mxu0 0
    %255 = vmatpush.bf16.msra.mxu0 0
    %256 = vmatpush.bf16.msra.mxu0 0
    %257 = vmatpush.bf16.msra.mxu0 0
    %258 = vmatpush.bf16.msra.mxu0 0
    %259 = vmatpush.bf16.msra.mxu0 %v250
    %260 = vmatmul.bf16.gmra.mxu0 %v247
    %v261 = vpop.f32.mrf.mxu0
    %v262 = vadd.f32 0.0, %v261
    %v263 = vpop.f32.mrf.mxu0
    %264 = vdwg.mxu0
    %v265 = vpack.c.bf16 %v262, %v262
    %267 = vrot.lane.b32.xlu0 %v265, 8
    %v268 = vpop.permute.xlu0 %267
    %vm270 = vcmask 126016
    %271 = vst.msk [vmem:[#allocation3] sm:$0xf] %vm270, %v268
    %v272 = vld [vmem:[#allocation2] sm:$0xf]
    %v274 = vunpack.c.l.b16 %v272
    %v275 = vpack.c.b16 %v274, %v274
    %276 = vrot.lane.b32.xlu0 %v275, 112
    %v277 = vpop.permute.xlu0 %276
    %278 = vrot.lane.b32.xlu0 %v275, 80
    %v279 = vpop.permute.xlu0 %278
    %v281 = vsel %vm148, %v277, 0
    %v284 = vsel %vm148, %v279, 0
    %286 = vmatpush.bf16.xpose.msra.mxu0 0
    %287 = vmatpush.bf16.xpose.msra.mxu0 0
    %288 = vmatpush.bf16.xpose.msra.mxu0 0
    %289 = vmatpush.bf16.xpose.msra.mxu0 0
    %290 = vmatpush.bf16.xpose.msra.mxu0 0
    %291 = vmatpush.bf16.xpose.msra.mxu0 0
    %292 = vmatpush.bf16.xpose.msra.mxu0 0
    %293 = vmatpush.bf16.xpose.msra.mxu0 %v284
    %294 = vmatmul.bf16.gmra.mxu0 %v281
    %v295 = vpop.f32.mrf.mxu0
    %v296 = vadd.f32 %v141, %v295
    %v297 = vpop.f32.mrf.mxu0
    %298 = vdwg.mxu0
    %v299 = vsel %vm148, %v296, -inf
    %300 = vmax.xlane.f32.xlu0 %v299
    %v301 = vpop.xlane.xlu0 %300
    %v302 = vsub.f32 %v296, %v301
    %v303 = vmul.f32 %v302, 1.442695
    %v304 = vpow.pop %v303
    %v305 = vsel %vm148, %v304, 0.0
    %306 = vadd.xlane.f32.xlu0 %v305
    %v307 = vpop.xlane.xlu0 %306
    %v308 = vrcp.pop %v307
    %v309 = vmul.f32 %v304, %v308
    %v310 = vpack.c.bf16 %v309, %v309
    %311 = vrot.lane.b32.xlu0 %v275, 48
    %v312 = vpop.permute.xlu0 %311
    %v314 = vsel %vm148, %v310, 0
    %v317 = vsel %vm185, %v312, 0
    %319 = vmatpush.bf16.msra.mxu0 0
    %320 = vmatpush.bf16.msra.mxu0 0
    %321 = vmatpush.bf16.msra.mxu0 0
    %322 = vmatpush.bf16.msra.mxu0 0
    %323 = vmatpush.bf16.msra.mxu0 0
    %324 = vmatpush.bf16.msra.mxu0 0
    %325 = vmatpush.bf16.msra.mxu0 0
    %326 = vmatpush.bf16.msra.mxu0 %v317
    %327 = vmatmul.bf16.gmra.mxu0 %v314
    %v328 = vpop.f32.mrf.mxu0
    %v329 = vadd.f32 0.0, %v328
    %v330 = vpop.f32.mrf.mxu0
    %331 = vdwg.mxu0
    %v332 = vpack.c.bf16 %v329, %v329
    %334 = vrot.lane.b32.xlu0 %v332, 16
    %v335 = vpop.permute.xlu0 %334
    %vm337 = vcmask 191616
    %338 = vst.msk [vmem:[#allocation3] sm:$0xf] %vm337, %v335
    %v339 = vld [vmem:[#allocation2] sm:$0xf]
    %v341 = vunpack.c.l.b16 %v339
    %v342 = vpack.c.b16 %v341, %v341
    %343 = vrot.lane.b32.xlu0 %v342, 104
    %v344 = vpop.permute.xlu0 %343
    %345 = vrot.lane.b32.xlu0 %v342, 72
    %v346 = vpop.permute.xlu0 %345
    %v348 = vsel %vm148, %v344, 0
    %v351 = vsel %vm148, %v346, 0
    %353 = vmatpush.bf16.xpose.msra.mxu0 0
    %354 = vmatpush.bf16.xpose.msra.mxu0 0
    %355 = vmatpush.bf16.xpose.msra.mxu0 0
    %356 = vmatpush.bf16.xpose.msra.mxu0 0
    %357 = vmatpush.bf16.xpose.msra.mxu0 0
    %358 = vmatpush.bf16.xpose.msra.mxu0 0
    %359 = vmatpush.bf16.xpose.msra.mxu0 0
    %360 = vmatpush.bf16.xpose.msra.mxu0 %v351
    %361 = vmatmul.bf16.gmra.mxu0 %v348
    %v362 = vpop.f32.mrf.mxu0
    %v363 = vadd.f32 %v141, %v362
    %v364 = vpop.f32.mrf.mxu0
    %365 = vdwg.mxu0
    %v366 = vsel %vm148, %v363, -inf
    %367 = vmax.xlane.f32.xlu0 %v366
    %v368 = vpop.xlane.xlu0 %367
    %v369 = vsub.f32 %v363, %v368
    %v370 = vmul.f32 %v369, 1.442695
    %v371 = vpow.pop %v370
    %v372 = vsel %vm148, %v371, 0.0
    %373 = vadd.xlane.f32.xlu0 %v372
    %v374 = vpop.xlane.xlu0 %373
    %v375 = vrcp.pop %v374
    %v376 = vmul.f32 %v371, %v375
    %v377 = vpack.c.bf16 %v376, %v376
    %378 = vrot.lane.b32.xlu0 %v342, 40
    %v379 = vpop.permute.xlu0 %378
    %v381 = vsel %vm148, %v377, 0
    %v384 = vsel %vm185, %v379, 0
    %386 = vmatpush.bf16.msra.mxu0 0
    %387 = vmatpush.bf16.msra.mxu0 0
    %388 = vmatpush.bf16.msra.mxu0 0
    %389 = vmatpush.bf16.msra.mxu0 0
    %390 = vmatpush.bf16.msra.mxu0 0
    %391 = vmatpush.bf16.msra.mxu0 0
    %392 = vmatpush.bf16.msra.mxu0 0
    %393 = vmatpush.bf16.msra.mxu0 %v384
    %394 = vmatmul.bf16.gmra.mxu0 %v381
    %v395 = vpop.f32.mrf.mxu0
    %v396 = vadd.f32 0.0, %v395
    %v397 = vpop.f32.mrf.mxu0
    %398 = vdwg.mxu0
    %v399 = vpack.c.bf16 %v396, %v396
    %401 = vrot.lane.b32.xlu0 %v399, 24
    %v402 = vpop.permute.xlu0 %401
    %vm404 = vcmask 257216
    %405 = vst.msk [vmem:[#allocation3] sm:$0xf] %vm404, %v402
    %s406 = scalar_lea.vmem [#allocation7], 1
    %v407 = vld [vmem:[%s406] sm:$0x1]
    %s408 = scalar_lea.vmem [#allocation2], 4
    %v409 = vld [vmem:[%s408] sm:$0xf]
    %v411 = vperm.slane %v407, 0
    %v414 = vunpack.c.l.b16 %v409
    %v415 = vpack.c.b16 %v414, %v414
    %416 = vrot.lane.b32.xlu0 %v415, 96
    %v417 = vpop.permute.xlu0 %416
    %v419 = vsel %vm148, %v409, 0
    %v422 = vsel %vm148, %v417, 0
    %424 = vmatpush.bf16.xpose.msra.mxu0 0
    %425 = vmatpush.bf16.xpose.msra.mxu0 0
    %426 = vmatpush.bf16.xpose.msra.mxu0 0
    %427 = vmatpush.bf16.xpose.msra.mxu0 0
    %428 = vmatpush.bf16.xpose.msra.mxu0 0
    %429 = vmatpush.bf16.xpose.msra.mxu0 0
    %430 = vmatpush.bf16.xpose.msra.mxu0 0
    %431 = vmatpush.bf16.xpose.msra.mxu0 %v422
    %432 = vmatmul.bf16.gmra.mxu0 %v419
    %v433 = vpop.f32.mrf.mxu0
    %v434 = vadd.f32 %v411, %v433
    %v435 = vpop.f32.mrf.mxu0
    %436 = vdwg.mxu0
    %v437 = vsel %vm148, %v434, -inf
    %438 = vmax.xlane.f32.xlu0 %v437
    %v439 = vpop.xlane.xlu0 %438
    %v440 = vsub.f32 %v434, %v439
    %v441 = vmul.f32 %v440, 1.442695
    %v442 = vpow.pop %v441
    %v443 = vsel %vm148, %v442, 0.0
    %444 = vadd.xlane.f32.xlu0 %v443
    %v445 = vpop.xlane.xlu0 %444
    %v446 = vrcp.pop %v445
    %v447 = vmul.f32 %v442, %v446
    %v448 = vpack.c.bf16 %v447, %v447
    %449 = vrot.lane.b32.xlu0 %v415, 64
    %v450 = vpop.permute.xlu0 %449
    %v452 = vsel %vm148, %v448, 0
    %v455 = vsel %vm185, %v450, 0
    %457 = vmatpush.bf16.msra.mxu0 0
    %458 = vmatpush.bf16.msra.mxu0 0
    %459 = vmatpush.bf16.msra.mxu0 0
    %460 = vmatpush.bf16.msra.mxu0 0
    %461 = vmatpush.bf16.msra.mxu0 0
    %462 = vmatpush.bf16.msra.mxu0 0
    %463 = vmatpush.bf16.msra.mxu0 0
    %464 = vmatpush.bf16.msra.mxu0 %v455
    %465 = vmatmul.bf16.gmra.mxu0 %v452
    %v466 = vpop.f32.mrf.mxu0
    %v467 = vadd.f32 0.0, %v466
    %v468 = vpop.f32.mrf.mxu0
    %469 = vdwg.mxu0
    %v470 = vpack.c.bf16 %v467, %v467
    %s471 = scalar_lea.vmem [#allocation3], 4
    %472 = vst.msk [vmem:[%s471] sm:$0xf] %vm203, %v470
    %v473 = vld [vmem:[%s408] sm:$0xf]
    %v475 = vunpack.c.l.b16 %v473
    %v476 = vpack.c.b16 %v475, %v475
    %477 = vrot.lane.b32.xlu0 %v476, 120
    %v478 = vpop.permute.xlu0 %477
    %479 = vrot.lane.b32.xlu0 %v476, 88
    %v480 = vpop.permute.xlu0 %479
    %v482 = vsel %vm148, %v478, 0
    %v485 = vsel %vm148, %v480, 0
    %487 = vmatpush.bf16.xpose.msra.mxu0 0
    %488 = vmatpush.bf16.xpose.msra.mxu0 0
    %489 = vmatpush.bf16.xpose.msra.mxu0 0
    %490 = vmatpush.bf16.xpose.msra.mxu0 0
    %491 = vmatpush.bf16.xpose.msra.mxu0 0
    %492 = vmatpush.bf16.xpose.msra.mxu0 0
    %493 = vmatpush.bf16.xpose.msra.mxu0 0
    %494 = vmatpush.bf16.xpose.msra.mxu0 %v485
    %495 = vmatmul.bf16.gmra.mxu0 %v482
    %v496 = vpop.f32.mrf.mxu0
    %v497 = vadd.f32 %v411, %v496
    %v498 = vpop.f32.mrf.mxu0
    %499 = vdwg.mxu0
    %v500 = vsel %vm148, %v497, -inf
    %501 = vmax.xlane.f32.xlu0 %v500
    %v502 = vpop.xlane.xlu0 %501
    %v503 = vsub.f32 %v497, %v502
    %v504 = vmul.f32 %v503, 1.442695
    %v505 = vpow.pop %v504
    %v506 = vsel %vm148, %v505, 0.0
    %507 = vadd.xlane.f32.xlu0 %v506
    %v508 = vpop.xlane.xlu0 %507
    %v509 = vrcp.pop %v508
    %v510 = vmul.f32 %v505, %v509
    %v511 = vpack.c.bf16 %v510, %v510
    %512 = vrot.lane.b32.xlu0 %v476, 56
    %v513 = vpop.permute.xlu0 %512
    %v515 = vsel %vm148, %v511, 0
    %v518 = vsel %vm185, %v513, 0
    %520 = vmatpush.bf16.msra.mxu0 0
    %521 = vmatpush.bf16.msra.mxu0 0
    %522 = vmatpush.bf16.msra.mxu0 0
    %523 = vmatpush.bf16.msra.mxu0 0
    %524 = vmatpush.bf16.msra.mxu0 0
    %525 = vmatpush.bf16.msra.mxu0 0
    %526 = vmatpush.bf16.msra.mxu0 0
    %527 = vmatpush.bf16.msra.mxu0 %v518
    %528 = vmatmul.bf16.gmra.mxu0 %v515
    %v529 = vpop.f32.mrf.mxu0
    %v530 = vadd.f32 0.0, %v529
    %v531 = vpop.f32.mrf.mxu0
    %532 = vdwg.mxu0
    %v533 = vpack.c.bf16 %v530, %v530
    %535 = vrot.lane.b32.xlu0 %v533, 8
    %v536 = vpop.permute.xlu0 %535
    %538 = vst.msk [vmem:[%s471] sm:$0xf] %vm270, %v536
    %v539 = vld [vmem:[%s408] sm:$0xf]
    %v541 = vunpack.c.l.b16 %v539
    %v542 = vpack.c.b16 %v541, %v541
    %543 = vrot.lane.b32.xlu0 %v542, 112
    %v544 = vpop.permute.xlu0 %543
    %545 = vrot.lane.b32.xlu0 %v542, 80
    %v546 = vpop.permute.xlu0 %545
    %v548 = vsel %vm148, %v544, 0
    %v551 = vsel %vm148, %v546, 0
    %553 = vmatpush.bf16.xpose.msra.mxu0 0
    %554 = vmatpush.bf16.xpose.msra.mxu0 0
    %555 = vmatpush.bf16.xpose.msra.mxu0 0
    %556 = vmatpush.bf16.xpose.msra.mxu0 0
    %557 = vmatpush.bf16.xpose.msra.mxu0 0
    %558 = vmatpush.bf16.xpose.msra.mxu0 0
    %559 = vmatpush.bf16.xpose.msra.mxu0 0
    %560 = vmatpush.bf16.xpose.msra.mxu0 %v551
    %561 = vmatmul.bf16.gmra.mxu0 %v548
    %v562 = vpop.f32.mrf.mxu0
    %v563 = vadd.f32 %v411, %v562
    %v564 = vpop.f32.mrf.mxu0
    %565 = vdwg.mxu0
    %v566 = vsel %vm148, %v563, -inf
    %567 = vmax.xlane.f32.xlu0 %v566
    %v568 = vpop.xlane.xlu0 %567
    %v569 = vsub.f32 %v563, %v568
    %v570 = vmul.f32 %v569, 1.442695
    %v571 = vpow.pop %v570
    %v572 = vsel %vm148, %v571, 0.0
    %573 = vadd.xlane.f32.xlu0 %v572
    %v574 = vpop.xlane.xlu0 %573
    %v575 = vrcp.pop %v574
    %v576 = vmul.f32 %v571, %v575
    %v577 = vpack.c.bf16 %v576, %v576
    %578 = vrot.lane.b32.xlu0 %v542, 48
    %v579 = vpop.permute.xlu0 %578
    %v581 = vsel %vm148, %v577, 0
    %v584 = vsel %vm185, %v579, 0
    %586 = vmatpush.bf16.msra.mxu0 0
    %587 = vmatpush.bf16.msra.mxu0 0
    %588 = vmatpush.bf16.msra.mxu0 0
    %589 = vmatpush.bf16.msra.mxu0 0
    %590 = vmatpush.bf16.msra.mxu0 0
    %591 = vmatpush.bf16.msra.mxu0 0
    %592 = vmatpush.bf16.msra.mxu0 0
    %593 = vmatpush.bf16.msra.mxu0 %v584
    %594 = vmatmul.bf16.gmra.mxu0 %v581
    %v595 = vpop.f32.mrf.mxu0
    %v596 = vadd.f32 0.0, %v595
    %v597 = vpop.f32.mrf.mxu0
    %598 = vdwg.mxu0
    %v599 = vpack.c.bf16 %v596, %v596
    %601 = vrot.lane.b32.xlu0 %v599, 16
    %v602 = vpop.permute.xlu0 %601
    %604 = vst.msk [vmem:[%s471] sm:$0xf] %vm337, %v602
    %v605 = vld [vmem:[%s408] sm:$0xf]
    %v607 = vunpack.c.l.b16 %v605
    %v608 = vpack.c.b16 %v607, %v607
    %609 = vrot.lane.b32.xlu0 %v608, 104
    %v610 = vpop.permute.xlu0 %609
    %611 = vrot.lane.b32.xlu0 %v608, 72
    %v612 = vpop.permute.xlu0 %611
    %v614 = vsel %vm148, %v610, 0
    %v617 = vsel %vm148, %v612, 0
    %619 = vmatpush.bf16.xpose.msra.mxu0 0
    %620 = vmatpush.bf16.xpose.msra.mxu0 0
    %621 = vmatpush.bf16.xpose.msra.mxu0 0
    %622 = vmatpush.bf16.xpose.msra.mxu0 0
    %623 = vmatpush.bf16.xpose.msra.mxu0 0
    %624 = vmatpush.bf16.xpose.msra.mxu0 0
    %625 = vmatpush.bf16.xpose.msra.mxu0 0
    %626 = vmatpush.bf16.xpose.msra.mxu0 %v617
    %627 = vmatmul.bf16.gmra.mxu0 %v614
    %v628 = vpop.f32.mrf.mxu0
    %v629 = vadd.f32 %v411, %v628
    %v630 = vpop.f32.mrf.mxu0
    %631 = vdwg.mxu0
    %v632 = vsel %vm148, %v629, -inf
    %633 = vmax.xlane.f32.xlu0 %v632
    %v634 = vpop.xlane.xlu0 %633
    %v635 = vsub.f32 %v629, %v634
    %v636 = vmul.f32 %v635, 1.442695
    %v637 = vpow.pop %v636
    %v638 = vsel %vm148, %v637, 0.0
    %639 = vadd.xlane.f32.xlu0 %v638
    %v640 = vpop.xlane.xlu0 %639
    %v641 = vrcp.pop %v640
    %v642 = vmul.f32 %v637, %v641
    %v643 = vpack.c.bf16 %v642, %v642
    %644 = vrot.lane.b32.xlu0 %v608, 40
    %v645 = vpop.permute.xlu0 %644
    %v647 = vsel %vm148, %v643, 0
    %v650 = vsel %vm185, %v645, 0
    %652 = vmatpush.bf16.msra.mxu0 0
    %653 = vmatpush.bf16.msra.mxu0 0
    %654 = vmatpush.bf16.msra.mxu0 0
    %655 = vmatpush.bf16.msra.mxu0 0
    %656 = vmatpush.bf16.msra.mxu0 0
    %657 = vmatpush.bf16.msra.mxu0 0
    %658 = vmatpush.bf16.msra.mxu0 0
    %659 = vmatpush.bf16.msra.mxu0 %v650
    %660 = vmatmul.bf16.gmra.mxu0 %v647
    %v661 = vpop.f32.mrf.mxu0
    %v662 = vadd.f32 0.0, %v661
    %v663 = vpop.f32.mrf.mxu0
    %664 = vdwg.mxu0
    %v665 = vpack.c.bf16 %v662, %v662
    %667 = vrot.lane.b32.xlu0 %v665, 24
    %v668 = vpop.permute.xlu0 %667
    %670 = vst.msk [vmem:[%s471] sm:$0xf] %vm404, %v668
    %v671 = vld [vmem:[#allocation3] sm:$0xf]
    %v672 = vld [vmem:[#allocation3 + $0x4] sm:$0xf]
    %v673 = vld [vmem:[#allocation10] sm:$0xf]
    %v674 = vld [vmem:[#allocation10 + $0x4] sm:$0xf]
    %v675 = vld [vmem:[#allocation10 + $0x8] sm:$0xf]
    %v676 = vld [vmem:[#allocation10 + $0xc] sm:$0xf]
    %v677 = vld [vmem:[%s5] sm:$0x1]
    %v679 = vperm.slane %v677, 0
    %v683 = vunpack.c.l.b16 %v671
    %v684 = vunpack.c.l.b16 %v672
    %v685 = vpack.c.b16 %v684, %v683
    %v690 = vunpack.c.l.b16 %v673
    %v691 = vunpack.c.l.b16 %v674
    %v692 = vunpack.c.l.b16 %v675
    %v693 = vunpack.c.l.b16 %v676
    %v694 = vpack.c.b16 %v691, %v690
    %v695 = vpack.c.b16 %v693, %v692
    %v699 = vsel %vm115, %v685, 0
    %701 = vmatpush.bf16.msra.mxu0 0
    %702 = vmatpush.bf16.msra.mxu0 0
    %703 = vmatpush.bf16.msra.mxu0 0
    %704 = vmatpush.bf16.msra.mxu0 0
    %705 = vmatpush.bf16.msra.mxu0 0
    %706 = vmatpush.bf16.msra.mxu0 0
    %707 = vmatpush.bf16.msra.mxu0 %v695
    %708 = vmatpush.bf16.msra.mxu0 %v694
    %709 = vmatmul.bf16.gmra.mxu0 %v699
    %v710 = vpop.f32.mrf.mxu0
    %v711 = vadd.f32 %v679, %v710
    %v712 = vpop.f32.mrf.mxu0
    %v713 = vadd.f32 %v679, %v712
    %714 = vdwg.mxu0
    %715 = vst.msk [vmem:[#allocation12] sm:$0xff] %vm115, %v711
    %716 = vst.msk [vmem:[#allocation12 + $0x8] sm:$0xff] %vm115, %v713
    // Predicated region
    $region42: #{tpu_custom_call.1} parent=1 // pred_check
      _
    $region43: #{tpu_custom_call.1} parent=1 // pred_check_branch
      %718 = sbr.rel (0) target = $region45
    $region44: #{tpu_custom_call.1} parent=1 // pred_region
      %720 = vsyncadd [#allocation6], 0
      %s721 = sshll.u32 [#allocation12], 4
      %s722 = int_to_ptr.vmem [resolvable:$true] %s721
      %s723 = sshll.u32 %s6, 4
      %s724 = int_to_ptr.hbm [resolvable:$true] %s723
      %729 = dma.vmem_to_hbm [thread:$0]  %s722, 256, %s724, [#allocation6], 128, 128, 8
    $region45: #{tpu_custom_call.1} parent=1 // pred_fallthru
      _
    // Predicated region
    $region46: #{tpu_custom_call.1} parent=1 // pred_check
      _
    $region47: #{tpu_custom_call.1} parent=1 // pred_check_branch
      %731 = sbr.rel (0) target = $region49
    $region48: #{tpu_custom_call.1} parent=1 // pred_region
      %733 = dma.done [#allocation6], 256
    $region49: #{tpu_custom_call.1} parent=1 // pred_fallthru
      _
    %734 = vsyncpa [#allocation5], 1
    %735 = vsyncpa [#allocation8], 1
    %736 = vsyncpa [#allocation11], 1
    %737 = vsyncpa [#allocation6], 1

// kernel: tpu_custom_call.1
$region0: #{tpu_custom_call.1}
  #allocation0 [shape = 'u32[]', space=smem, size = 0x4, offset = 0x4, fixed_abs, tag = 'smem constant byte address 0x4 - core index']
  #allocation1 [shape = 'u32[72,128]{1,0:T(1,128)}', space=vmem, size = 0x9000, scoped, tag = 'internal scratch']
  #allocation2 [shape = 'bf16[16,96]{1,0:T(8,128)(2,1)}', space=vmem, size = 0x1000, scoped, tag = 'scratch operand']
  #allocation3 [shape = 'bf16[16,32]{1,0:T(8,128)(2,1)}', space=vmem, size = 0x1000, scoped, tag = 'scratch operand']
  %s0 = inlined_call_operand.hbm [shape: bf16[2,8,32], index: 0, kind: input, shape index: {}]
  %s1 = inlined_call_operand.hbm [shape: f32[2,1,8], index: 1, kind: input, shape index: {}]
  %s2 = inlined_call_operand.hbm [shape: bf16[32,96], index: 2, kind: input, shape index: {}]
  %s3 = inlined_call_operand.vmem [shape: f32[1,96], index: 3, kind: input, shape index: {}]
  %s4 = inlined_call_operand.hbm [shape: bf16[32,32], index: 4, kind: input, shape index: {}]
  %s5 = inlined_call_operand.vmem [shape: f32[1,32], index: 5, kind: input, shape index: {}]
  %s6 = inlined_call_operand.hbm [shape: f32[2,8,32], index: 6, kind: output, shape index: {}]
  %s7 = sld [smem:[#allocation0]]
  $region50: #{tpu_custom_call.1} parent=0
    _
  %s9 = ssub.s32 1, %s7
  %s10 = scalar_select 0, %s9, %s7
  $region1: #{tpu_custom_call.1} parent=0
    #allocation4 [shape = 'u8[4096]{0}', space=vmem, size = 0x1000, scoped, tag = 'input window, operand 0, single buffered']
    #allocation5 [shape = 's32[1]{0}', space=sflag, size = 0x4, scoped, tag = 'scoped memory for tpu_custom_call.1']
    #allocation6 [shape = 's32[1]{0}', space=sflag, size = 0x4, scoped, tag = 'scoped memory for tpu_custom_call.1']
    #allocation7 [shape = 'u8[1024]{0}', space=vmem, size = 0x400, scoped, tag = 'input window, operand 1, single buffered']
    #allocation8 [shape = 's32[1]{0}', space=sflag, size = 0x4, scoped, tag = 'scoped memory for tpu_custom_call.1']
    #allocation9 [shape = 'u8[8192]{0}', space=vmem, size = 0x2000, scoped, tag = 'input window, operand 2, single buffered']
    #allocation10 [shape = 'u8[8192]{0}', space=vmem, size = 0x2000, scoped, tag = 'input window, operand 4, single buffered']
    #allocation11 [shape = 's32[1]{0}', space=sflag, size = 0x4, scoped, tag = 'scoped memory for tpu_custom_call.1']
    #allocation12 [shape = 'u8[8192]{0}', space=vmem, size = 0x2000, scoped, tag = 'output window, operand 0, single buffered']
    %11 = vsyncpa [#allocation5], 0
    %12 = vsyncpa [#allocation8], 0
    %13 = vsyncpa [#allocation11], 0
    %14 = vsyncpa [#allocation6], 0
    // Predicated region
    $region2: #{tpu_custom_call.1} parent=1 // pred_check
      _
    $region3: #{tpu_custom_call.1} parent=1 // pred_check_branch
      %16 = sbr.rel (0) target = $region5
    $region4: #{tpu_custom_call.1} parent=1 // pred_region
      %18 = vsyncadd [#allocation5], 0
      %s19 = sshll.u32 %s0, 4
      %s20 = int_to_ptr.hbm [resolvable:$true] %s19
      %s21 = sshll.u32 [#allocation4], 4
      %s22 = int_to_ptr.vmem [resolvable:$true] %s21
      %27 = dma.hbm_to_vmem [thread:$0]  %s20, 128, %s22, [#allocation5], 64, 64, 4
    $region5: #{tpu_custom_call.1} parent=1 // pred_fallthru
      _
    // Predicated region
    $region6: #{tpu_custom_call.1} parent=1 // pred_check
      _
    $region7: #{tpu_custom_call.1} parent=1 // pred_check_branch
      %29 = sbr.rel (0) target = $region9
    $region8: #{tpu_custom_call.1} parent=1 // pred_region
      %31 = vsyncadd [#allocation8], 0
      %s32 = sshll.u32 %s1, 4
      %s33 = int_to_ptr.hbm [resolvable:$true] %s32
      %s34 = sshll.u32 [#allocation7], 4
      %s35 = int_to_ptr.vmem [resolvable:$true] %s34
      %40 = dma.hbm_to_vmem [thread:$0]  %s33, 32, %s35, [#allocation8], 16, 16, 1
    $region9: #{tpu_custom_call.1} parent=1 // pred_fallthru
      _
    // Predicated region
    $region10: #{tpu_custom_call.1} parent=1 // pred_check
      _
    $region11: #{tpu_custom_call.1} parent=1 // pred_check_branch
      %42 = sbr.rel (0) target = $region13
    $region12: #{tpu_custom_call.1} parent=1 // pred_region
      %44 = vsyncadd [#allocation8], 0
      %s45 = sshll.u32 %s2, 4
      %s46 = int_to_ptr.hbm [resolvable:$true] %s45
      %s47 = sshll.u32 [#allocation9], 4
      %s48 = int_to_ptr.vmem [resolvable:$true] %s47
      %53 = dma.hbm_to_vmem [thread:$0]  %s46, 256, %s48, [#allocation8], 64, 64, 4
    $region13: #{tpu_custom_call.1} parent=1 // pred_fallthru
      _
    // Predicated region
    $region14: #{tpu_custom_call.1} parent=1 // pred_check
      _
    $region15: #{tpu_custom_call.1} parent=1 // pred_check_branch
      %55 = sbr.rel (0) target = $region17
    $region16: #{tpu_custom_call.1} parent=1 // pred_region
      _
    $region17: #{tpu_custom_call.1} parent=1 // pred_fallthru
      _
    // Predicated region
    $region18: #{tpu_custom_call.1} parent=1 // pred_check
      _
    $region19: #{tpu_custom_call.1} parent=1 // pred_check_branch
      %57 = sbr.rel (0) target = $region21
    $region20: #{tpu_custom_call.1} parent=1 // pred_region
      %59 = vsyncadd [#allocation11], 0
      %s60 = sshll.u32 %s4, 4
      %s61 = int_to_ptr.hbm [resolvable:$true] %s60
      %s62 = sshll.u32 [#allocation10], 4
      %s63 = int_to_ptr.vmem [resolvable:$true] %s62
      %68 = dma.hbm_to_vmem [thread:$0]  %s61, 256, %s63, [#allocation11], 64, 64, 4
    $region21: #{tpu_custom_call.1} parent=1 // pred_fallthru
      _
    // Predicated region
    $region22: #{tpu_custom_call.1} parent=1 // pred_check
      _
    $region23: #{tpu_custom_call.1} parent=1 // pred_check_branch
      %70 = sbr.rel (0) target = $region25
    $region24: #{tpu_custom_call.1} parent=1 // pred_region
      _
    $region25: #{tpu_custom_call.1} parent=1 // pred_fallthru
      _
    // Predicated region
    $region26: #{tpu_custom_call.1} parent=1 // pred_check
      _
    $region27: #{tpu_custom_call.1} parent=1 // pred_check_branch
      %72 = sbr.rel (0) target = $region29
    $region28: #{tpu_custom_call.1} parent=1 // pred_region
      %74 = dma.done [#allocation5], 128
    $region29: #{tpu_custom_call.1} parent=1 // pred_fallthru
      _
    // Predicated region
    $region30: #{tpu_custom_call.1} parent=1 // pred_check
      _
    $region31: #{tpu_custom_call.1} parent=1 // pred_check_branch
      %76 = sbr.rel (0) target = $region33
    $region32: #{tpu_custom_call.1} parent=1 // pred_region
      %78 = dma.done [#allocation8], 32
    $region33: #{tpu_custom_call.1} parent=1 // pred_fallthru
      _
    // Predicated region
    $region34: #{tpu_custom_call.1} parent=1 // pred_check
      _
    $region35: #{tpu_custom_call.1} parent=1 // pred_check_branch
      %80 = sbr.rel (0) target = $region37
    $region36: #{tpu_custom_call.1} parent=1 // pred_region
      %82 = dma.done [#allocation8], 256
    $region37: #{tpu_custom_call.1} parent=1 // pred_fallthru
      _
    // Predicated region
    $region38: #{tpu_custom_call.1} parent=1 // pred_check
      _
    $region39: #{tpu_custom_call.1} parent=1 // pred_check_branch
      %84 = sbr.rel (0) target = $region41
    $region40: #{tpu_custom_call.1} parent=1 // pred_region
      %86 = dma.done [#allocation11], 256
    $region41: #{tpu_custom_call.1} parent=1 // pred_fallthru
      _
    %v88 = vld [vmem:[#allocation4] sm:$0xf]
    %v89 = vld [vmem:[#allocation4 + $0x4] sm:$0xf]
    %v90 = vld [vmem:[#allocation9] sm:$0xf]
    %v91 = vld [vmem:[#allocation9 + $0x4] sm:$0xf]
    %v92 = vld [vmem:[#allocation9 + $0x8] sm:$0xf]
    %v93 = vld [vmem:[#allocation9 + $0xc] sm:$0xf]
    %v94 = vld [vmem:[%s3] sm:$0x1]
    %v96 = vperm.slane %v94, 0
    %v100 = vunpack.c.l.b16 %v88
    %v101 = vunpack.c.l.b16 %v89
    %v102 = vpack.c.b16 %v101, %v100
    %v107 = vunpack.c.l.b16 %v90
    %v108 = vunpack.c.l.b16 %v91
    %v109 = vunpack.c.l.b16 %v92
    %v110 = vunpack.c.l.b16 %v93
    %v111 = vpack.c.b16 %v108, %v107
    %v112 = vpack.c.b16 %v110, %v109
    %vm115 = vcmask 261120
    %v117 = vsel %vm115, %v102, 0
    %119 = vmatpush.bf16.msra.mxu0 0
    %120 = vmatpush.bf16.msra.mxu0 0
    %121 = vmatpush.bf16.msra.mxu0 0
    %122 = vmatpush.bf16.msra.mxu0 0
    %123 = vmatpush.bf16.msra.mxu0 0
    %124 = vmatpush.bf16.msra.mxu0 0
    %125 = vmatpush.bf16.msra.mxu0 %v112
    %126 = vmatpush.bf16.msra.mxu0 %v111
    %127 = vmatmul.bf16.gmra.mxu0 %v117
    %v128 = vpop.f32.mrf.mxu0
    %v129 = vadd.f32 %v96, %v128
    %v130 = vpop.f32.mrf.mxu0
    %v131 = vadd.f32 %v96, %v130
    %132 = vdwg.mxu0
    %v133 = vpack.c.bf16 %v129, %v129
    %v134 = vpack.c.bf16 %v131, %v131
    %vm135 = vcmask 781312
    %136 = vst.msk [vmem:[#allocation2] sm:$0xf] %vm135, %v133
    %137 = vst.msk [vmem:[#allocation2 + $0x4] sm:$0xf] %vm135, %v134
    %v138 = vld [vmem:[#allocation7] sm:$0x1]
    %v139 = vld [vmem:[#allocation2] sm:$0xf]
    %v141 = vperm.slane %v138, 0
    %v144 = vunpack.c.l.b16 %v139
    %v145 = vpack.c.b16 %v144, %v144
    %146 = vrot.lane.b32.xlu0 %v145, 96
    %v147 = vpop.permute.xlu0 %146
    %vm148 = vcmask 64512
    %v150 = vsel %vm148, %v139, 0
    %v153 = vsel %vm148, %v147, 0
    %155 = vmatpush.bf16.xpose.msra.mxu0 0
    %156 = vmatpush.bf16.xpose.msra.mxu0 0
    %157 = vmatpush.bf16.xpose.msra.mxu0 0
    %158 = vmatpush.bf16.xpose.msra.mxu0 0
    %159 = vmatpush.bf16.xpose.msra.mxu0 0
    %160 = vmatpush.bf16.xpose.msra.mxu0 0
    %161 = vmatpush.bf16.xpose.msra.mxu0 0
    %162 = vmatpush.bf16.xpose.msra.mxu0 %v153
    %163 = vmatmul.bf16.gmra.mxu0 %v150
    %v164 = vpop.f32.mrf.mxu0
    %v165 = vadd.f32 %v141, %v164
    %v166 = vpop.f32.mrf.mxu0
    %167 = vdwg.mxu0
    %v168 = vsel %vm148, %v165, -inf
    %169 = vmax.xlane.f32.xlu0 %v168
    %v170 = vpop.xlane.xlu0 %169
    %v171 = vsub.f32 %v165, %v170
    %v172 = vmul.f32 %v171, 1.442695
    %v173 = vpow.pop %v172
    %v174 = vsel %vm148, %v173, 0.0
    %175 = vadd.xlane.f32.xlu0 %v174
    %v176 = vpop.xlane.xlu0 %175
    %v177 = vrcp.pop %v176
    %v178 = vmul.f32 %v173, %v177
    %v179 = vpack.c.bf16 %v178, %v178
    %180 = vrot.lane.b32.xlu0 %v145, 64
    %v181 = vpop.permute.xlu0 %180
    %v183 = vsel %vm148, %v179, 0
    %vm185 = vcmask 1043456
    %v187 = vsel %vm185, %v181, 0
    %189 = vmatpush.bf16.msra.mxu0 0
    %190 = vmatpush.bf16.msra.mxu0 0
    %191 = vmatpush.bf16.msra.mxu0 0
    %192 = vmatpush.bf16.msra.mxu0 0
    %193 = vmatpush.bf16.msra.mxu0 0
    %194 = vmatpush.bf16.msra.mxu0 0
    %195 = vmatpush.bf16.msra.mxu0 0
    %196 = vmatpush.bf16.msra.mxu0 %v187
    %197 = vmatmul.bf16.gmra.mxu0 %v183
    %v198 = vpop.f32.mrf.mxu0
    %v199 = vadd.f32 0.0, %v198
    %v200 = vpop.f32.mrf.mxu0
    %201 = vdwg.mxu0
    %v202 = vpack.c.bf16 %v199, %v199
    %vm203 = vcmask 60416
    %204 = vst.msk [vmem:[#allocation3] sm:$0xf] %vm203, %v202
    %v205 = vld [vmem:[#allocation2] sm:$0xf]
    %v207 = vunpack.c.l.b16 %v205
    %v208 = vpack.c.b16 %v207, %v207
    %209 = vrot.lane.b32.xlu0 %v208, 120
    %v210 = vpop.permute.xlu0 %209
    %211 = vrot.lane.b32.xlu0 %v208, 88
    %v212 = vpop.permute.xlu0 %211
    %v214 = vsel %vm148, %v210, 0
    %v217 = vsel %vm148, %v212, 0
    %219 = vmatpush.bf16.xpose.msra.mxu0 0
    %220 = vmatpush.bf16.xpose.msra.mxu0 0
    %221 = vmatpush.bf16.xpose.msra.mxu0 0
    %222 = vmatpush.bf16.xpose.msra.mxu0 0
    %223 = vmatpush.bf16.xpose.msra.mxu0 0
    %224 = vmatpush.bf16.xpose.msra.mxu0 0
    %225 = vmatpush.bf16.xpose.msra.mxu0 0
    %226 = vmatpush.bf16.xpose.msra.mxu0 %v217
    %227 = vmatmul.bf16.gmra.mxu0 %v214
    %v228 = vpop.f32.mrf.mxu0
    %v229 = vadd.f32 %v141, %v228
    %v230 = vpop.f32.mrf.mxu0
    %231 = vdwg.mxu0
    %v232 = vsel %vm148, %v229, -inf
    %233 = vmax.xlane.f32.xlu0 %v232
    %v234 = vpop.xlane.xlu0 %233
    %v235 = vsub.f32 %v229, %v234
    %v236 = vmul.f32 %v235, 1.442695
    %v237 = vpow.pop %v236
    %v238 = vsel %vm148, %v237, 0.0
    %239 = vadd.xlane.f32.xlu0 %v238
    %v240 = vpop.xlane.xlu0 %239
    %v241 = vrcp.pop %v240
    %v242 = vmul.f32 %v237, %v241
    %v243 = vpack.c.bf16 %v242, %v242
    %244 = vrot.lane.b32.xlu0 %v208, 56
    %v245 = vpop.permute.xlu0 %244
    %v247 = vsel %vm148, %v243, 0
    %v250 = vsel %vm185, %v245, 0
    %252 = vmatpush.bf16.msra.mxu0 0
    %253 = vmatpush.bf16.msra.mxu0 0
    %254 = vmatpush.bf16.msra.mxu0 0
    %255 = vmatpush.bf16.msra.mxu0 0
    %256 = vmatpush.bf16.msra.mxu0 0
    %257 = vmatpush.bf16.msra.mxu0 0
    %258 = vmatpush.bf16.msra.mxu0 0
    %259 = vmatpush.bf16.msra.mxu0 %v250
    %260 = vmatmul.bf16.gmra.mxu0 %v247
    %v261 = vpop.f32.mrf.mxu0
    %v262 = vadd.f32 0.0, %v261
    %v263 = vpop.f32.mrf.mxu0
    %264 = vdwg.mxu0
    %v265 = vpack.c.bf16 %v262, %v262
    %267 = vrot.lane.b32.xlu0 %v265, 8
    %v268 = vpop.permute.xlu0 %267
    %vm270 = vcmask 126016
    %271 = vst.msk [vmem:[#allocation3] sm:$0xf] %vm270, %v268
    %v272 = vld [vmem:[#allocation2] sm:$0xf]
    %v274 = vunpack.c.l.b16 %v272
    %v275 = vpack.c.b16 %v274, %v274
    %276 = vrot.lane.b32.xlu0 %v275, 112
    %v277 = vpop.permute.xlu0 %276
    %278 = vrot.lane.b32.xlu0 %v275, 80
    %v279 = vpop.permute.xlu0 %278
    %v281 = vsel %vm148, %v277, 0
    %v284 = vsel %vm148, %v279, 0
    %286 = vmatpush.bf16.xpose.msra.mxu0 0
    %287 = vmatpush.bf16.xpose.msra.mxu0 0
    %288 = vmatpush.bf16.xpose.msra.mxu0 0
    %289 = vmatpush.bf16.xpose.msra.mxu0 0
    %290 = vmatpush.bf16.xpose.msra.mxu0 0
    %291 = vmatpush.bf16.xpose.msra.mxu0 0
    %292 = vmatpush.bf16.xpose.msra.mxu0 0
    %293 = vmatpush.bf16.xpose.msra.mxu0 %v284
    %294 = vmatmul.bf16.gmra.mxu0 %v281
    %v295 = vpop.f32.mrf.mxu0
    %v296 = vadd.f32 %v141, %v295
    %v297 = vpop.f32.mrf.mxu0
    %298 = vdwg.mxu0
    %v299 = vsel %vm148, %v296, -inf
    %300 = vmax.xlane.f32.xlu0 %v299
    %v301 = vpop.xlane.xlu0 %300
    %v302 = vsub.f32 %v296, %v301
    %v303 = vmul.f32 %v302, 1.442695
    %v304 = vpow.pop %v303
    %v305 = vsel %vm148, %v304, 0.0
    %306 = vadd.xlane.f32.xlu0 %v305
    %v307 = vpop.xlane.xlu0 %306
    %v308 = vrcp.pop %v307
    %v309 = vmul.f32 %v304, %v308
    %v310 = vpack.c.bf16 %v309, %v309
    %311 = vrot.lane.b32.xlu0 %v275, 48
    %v312 = vpop.permute.xlu0 %311
    %v314 = vsel %vm148, %v310, 0
    %v317 = vsel %vm185, %v312, 0
    %319 = vmatpush.bf16.msra.mxu0 0
    %320 = vmatpush.bf16.msra.mxu0 0
    %321 = vmatpush.bf16.msra.mxu0 0
    %322 = vmatpush.bf16.msra.mxu0 0
    %323 = vmatpush.bf16.msra.mxu0 0
    %324 = vmatpush.bf16.msra.mxu0 0
    %325 = vmatpush.bf16.msra.mxu0 0
    %326 = vmatpush.bf16.msra.mxu0 %v317
    %327 = vmatmul.bf16.gmra.mxu0 %v314
    %v328 = vpop.f32.mrf.mxu0
    %v329 = vadd.f32 0.0, %v328
    %v330 = vpop.f32.mrf.mxu0
    %331 = vdwg.mxu0
    %v332 = vpack.c.bf16 %v329, %v329
    %334 = vrot.lane.b32.xlu0 %v332, 16
    %v335 = vpop.permute.xlu0 %334
    %vm337 = vcmask 191616
    %338 = vst.msk [vmem:[#allocation3] sm:$0xf] %vm337, %v335
    %v339 = vld [vmem:[#allocation2] sm:$0xf]
    %v341 = vunpack.c.l.b16 %v339
    %v342 = vpack.c.b16 %v341, %v341
    %343 = vrot.lane.b32.xlu0 %v342, 104
    %v344 = vpop.permute.xlu0 %343
    %345 = vrot.lane.b32.xlu0 %v342, 72
    %v346 = vpop.permute.xlu0 %345
    %v348 = vsel %vm148, %v344, 0
    %v351 = vsel %vm148, %v346, 0
    %353 = vmatpush.bf16.xpose.msra.mxu0 0
    %354 = vmatpush.bf16.xpose.msra.mxu0 0
    %355 = vmatpush.bf16.xpose.msra.mxu0 0
    %356 = vmatpush.bf16.xpose.msra.mxu0 0
    %357 = vmatpush.bf16.xpose.msra.mxu0 0
    %358 = vmatpush.bf16.xpose.msra.mxu0 0
    %359 = vmatpush.bf16.xpose.msra.mxu0 0
    %360 = vmatpush.bf16.xpose.msra.mxu0 %v351
    %361 = vmatmul.bf16.gmra.mxu0 %v348
    %v362 = vpop.f32.mrf.mxu0
    %v363 = vadd.f32 %v141, %v362
    %v364 = vpop.f32.mrf.mxu0
    %365 = vdwg.mxu0
    %v366 = vsel %vm148, %v363, -inf
    %367 = vmax.xlane.f32.xlu0 %v366
    %v368 = vpop.xlane.xlu0 %367
    %v369 = vsub.f32 %v363, %v368
    %v370 = vmul.f32 %v369, 1.442695
    %v371 = vpow.pop %v370
    %v372 = vsel %vm148, %v371, 0.0
    %373 = vadd.xlane.f32.xlu0 %v372
    %v374 = vpop.xlane.xlu0 %373
    %v375 = vrcp.pop %v374
    %v376 = vmul.f32 %v371, %v375
    %v377 = vpack.c.bf16 %v376, %v376
    %378 = vrot.lane.b32.xlu0 %v342, 40
    %v379 = vpop.permute.xlu0 %378
    %v381 = vsel %vm148, %v377, 0
    %v384 = vsel %vm185, %v379, 0
    %386 = vmatpush.bf16.msra.mxu0 0
    %387 = vmatpush.bf16.msra.mxu0 0
    %388 = vmatpush.bf16.msra.mxu0 0
    %389 = vmatpush.bf16.msra.mxu0 0
    %390 = vmatpush.bf16.msra.mxu0 0
    %391 = vmatpush.bf16.msra.mxu0 0
    %392 = vmatpush.bf16.msra.mxu0 0
    %393 = vmatpush.bf16.msra.mxu0 %v384
    %394 = vmatmul.bf16.gmra.mxu0 %v381
    %v395 = vpop.f32.mrf.mxu0
    %v396 = vadd.f32 0.0, %v395
    %v397 = vpop.f32.mrf.mxu0
    %398 = vdwg.mxu0
    %v399 = vpack.c.bf16 %v396, %v396
    %401 = vrot.lane.b32.xlu0 %v399, 24
    %v402 = vpop.permute.xlu0 %401
    %vm404 = vcmask 257216
    %405 = vst.msk [vmem:[#allocation3] sm:$0xf] %vm404, %v402
    %s406 = scalar_lea.vmem [#allocation7], 1
    %v407 = vld [vmem:[%s406] sm:$0x1]
    %s408 = scalar_lea.vmem [#allocation2], 4
    %v409 = vld [vmem:[%s408] sm:$0xf]
    %v411 = vperm.slane %v407, 0
    %v414 = vunpack.c.l.b16 %v409
    %v415 = vpack.c.b16 %v414, %v414
    %416 = vrot.lane.b32.xlu0 %v415, 96
    %v417 = vpop.permute.xlu0 %416
    %v419 = vsel %vm148, %v409, 0
    %v422 = vsel %vm148, %v417, 0
    %424 = vmatpush.bf16.xpose.msra.mxu0 0
    %425 = vmatpush.bf16.xpose.msra.mxu0 0
    %426 = vmatpush.bf16.xpose.msra.mxu0 0
    %427 = vmatpush.bf16.xpose.msra.mxu0 0
    %428 = vmatpush.bf16.xpose.msra.mxu0 0
    %429 = vmatpush.bf16.xpose.msra.mxu0 0
    %430 = vmatpush.bf16.xpose.msra.mxu0 0
    %431 = vmatpush.bf16.xpose.msra.mxu0 %v422
    %432 = vmatmul.bf16.gmra.mxu0 %v419
    %v433 = vpop.f32.mrf.mxu0
    %v434 = vadd.f32 %v411, %v433
    %v435 = vpop.f32.mrf.mxu0
    %436 = vdwg.mxu0
    %v437 = vsel %vm148, %v434, -inf
    %438 = vmax.xlane.f32.xlu0 %v437
    %v439 = vpop.xlane.xlu0 %438
    %v440 = vsub.f32 %v434, %v439
    %v441 = vmul.f32 %v440, 1.442695
    %v442 = vpow.pop %v441
    %v443 = vsel %vm148, %v442, 0.0
    %444 = vadd.xlane.f32.xlu0 %v443
    %v445 = vpop.xlane.xlu0 %444
    %v446 = vrcp.pop %v445
    %v447 = vmul.f32 %v442, %v446
    %v448 = vpack.c.bf16 %v447, %v447
    %449 = vrot.lane.b32.xlu0 %v415, 64
    %v450 = vpop.permute.xlu0 %449
    %v452 = vsel %vm148, %v448, 0
    %v455 = vsel %vm185, %v450, 0
    %457 = vmatpush.bf16.msra.mxu0 0
    %458 = vmatpush.bf16.msra.mxu0 0
    %459 = vmatpush.bf16.msra.mxu0 0
    %460 = vmatpush.bf16.msra.mxu0 0
    %461 = vmatpush.bf16.msra.mxu0 0
    %462 = vmatpush.bf16.msra.mxu0 0
    %463 = vmatpush.bf16.msra.mxu0 0
    %464 = vmatpush.bf16.msra.mxu0 %v455
    %465 = vmatmul.bf16.gmra.mxu0 %v452
    %v466 = vpop.f32.mrf.mxu0
    %v467 = vadd.f32 0.0, %v466
    %v468 = vpop.f32.mrf.mxu0
    %469 = vdwg.mxu0
    %v470 = vpack.c.bf16 %v467, %v467
    %s471 = scalar_lea.vmem [#allocation3], 4
    %472 = vst.msk [vmem:[%s471] sm:$0xf] %vm203, %v470
    %v473 = vld [vmem:[%s408] sm:$0xf]
    %v475 = vunpack.c.l.b16 %v473
    %v476 = vpack.c.b16 %v475, %v475
    %477 = vrot.lane.b32.xlu0 %v476, 120
    %v478 = vpop.permute.xlu0 %477
    %479 = vrot.lane.b32.xlu0 %v476, 88
    %v480 = vpop.permute.xlu0 %479
    %v482 = vsel %vm148, %v478, 0
    %v485 = vsel %vm148, %v480, 0
    %487 = vmatpush.bf16.xpose.msra.mxu0 0
    %488 = vmatpush.bf16.xpose.msra.mxu0 0
    %489 = vmatpush.bf16.xpose.msra.mxu0 0
    %490 = vmatpush.bf16.xpose.msra.mxu0 0
    %491 = vmatpush.bf16.xpose.msra.mxu0 0
    %492 = vmatpush.bf16.xpose.msra.mxu0 0
    %493 = vmatpush.bf16.xpose.msra.mxu0 0
    %494 = vmatpush.bf16.xpose.msra.mxu0 %v485
    %495 = vmatmul.bf16.gmra.mxu0 %v482
    %v496 = vpop.f32.mrf.mxu0
    %v497 = vadd.f32 %v411, %v496
    %v498 = vpop.f32.mrf.mxu0
    %499 = vdwg.mxu0
    %v500 = vsel %vm148, %v497, -inf
    %501 = vmax.xlane.f32.xlu0 %v500
    %v502 = vpop.xlane.xlu0 %501
    %v503 = vsub.f32 %v497, %v502
    %v504 = vmul.f32 %v503, 1.442695
    %v505 = vpow.pop %v504
    %v506 = vsel %vm148, %v505, 0.0
    %507 = vadd.xlane.f32.xlu0 %v506
    %v508 = vpop.xlane.xlu0 %507
    %v509 = vrcp.pop %v508
    %v510 = vmul.f32 %v505, %v509
    %v511 = vpack.c.bf16 %v510, %v510
    %512 = vrot.lane.b32.xlu0 %v476, 56
    %v513 = vpop.permute.xlu0 %512
    %v515 = vsel %vm148, %v511, 0
    %v518 = vsel %vm185, %v513, 0
    %520 = vmatpush.bf16.msra.mxu0 0
    %521 = vmatpush.bf16.msra.mxu0 0
    %522 = vmatpush.bf16.msra.mxu0 0
    %523 = vmatpush.bf16.msra.mxu0 0
    %524 = vmatpush.bf16.msra.mxu0 0
    %525 = vmatpush.bf16.msra.mxu0 0
    %526 = vmatpush.bf16.msra.mxu0 0
    %527 = vmatpush.bf16.msra.mxu0 %v518
    %528 = vmatmul.bf16.gmra.mxu0 %v515
    %v529 = vpop.f32.mrf.mxu0
    %v530 = vadd.f32 0.0, %v529
    %v531 = vpop.f32.mrf.mxu0
    %532 = vdwg.mxu0
    %v533 = vpack.c.bf16 %v530, %v530
    %535 = vrot.lane.b32.xlu0 %v533, 8
    %v536 = vpop.permute.xlu0 %535
    %538 = vst.msk [vmem:[%s471] sm:$0xf] %vm270, %v536
    %v539 = vld [vmem:[%s408] sm:$0xf]
    %v541 = vunpack.c.l.b16 %v539
    %v542 = vpack.c.b16 %v541, %v541
    %543 = vrot.lane.b32.xlu0 %v542, 112
    %v544 = vpop.permute.xlu0 %543
    %545 = vrot.lane.b32.xlu0 %v542, 80
    %v546 = vpop.permute.xlu0 %545
    %v548 = vsel %vm148, %v544, 0
    %v551 = vsel %vm148, %v546, 0
    %553 = vmatpush.bf16.xpose.msra.mxu0 0
    %554 = vmatpush.bf16.xpose.msra.mxu0 0
    %555 = vmatpush.bf16.xpose.msra.mxu0 0
    %556 = vmatpush.bf16.xpose.msra.mxu0 0
    %557 = vmatpush.bf16.xpose.msra.mxu0 0
    %558 = vmatpush.bf16.xpose.msra.mxu0 0
    %559 = vmatpush.bf16.xpose.msra.mxu0 0
    %560 = vmatpush.bf16.xpose.msra.mxu0 %v551
    %561 = vmatmul.bf16.gmra.mxu0 %v548
    %v562 = vpop.f32.mrf.mxu0
    %v563 = vadd.f32 %v411, %v562
    %v564 = vpop.f32.mrf.mxu0
    %565 = vdwg.mxu0
    %v566 = vsel %vm148, %v563, -inf
    %567 = vmax.xlane.f32.xlu0 %v566
    %v568 = vpop.xlane.xlu0 %567
    %v569 = vsub.f32 %v563, %v568
    %v570 = vmul.f32 %v569, 1.442695
    %v571 = vpow.pop %v570
    %v572 = vsel %vm148, %v571, 0.0
    %573 = vadd.xlane.f32.xlu0 %v572
    %v574 = vpop.xlane.xlu0 %573
    %v575 = vrcp.pop %v574
    %v576 = vmul.f32 %v571, %v575
    %v577 = vpack.c.bf16 %v576, %v576
    %578 = vrot.lane.b32.xlu0 %v542, 48
    %v579 = vpop.permute.xlu0 %578
    %v581 = vsel %vm148, %v577, 0
    %v584 = vsel %vm185, %v579, 0
    %586 = vmatpush.bf16.msra.mxu0 0
    %587 = vmatpush.bf16.msra.mxu0 0
    %588 = vmatpush.bf16.msra.mxu0 0
    %589 = vmatpush.bf16.msra.mxu0 0
    %590 = vmatpush.bf16.msra.mxu0 0
    %591 = vmatpush.bf16.msra.mxu0 0
    %592 = vmatpush.bf16.msra.mxu0 0
    %593 = vmatpush.bf16.msra.mxu0 %v584
    %594 = vmatmul.bf16.gmra.mxu0 %v581
    %v595 = vpop.f32.mrf.mxu0
    %v596 = vadd.f32 0.0, %v595
    %v597 = vpop.f32.mrf.mxu0
    %598 = vdwg.mxu0
    %v599 = vpack.c.bf16 %v596, %v596
    %601 = vrot.lane.b32.xlu0 %v599, 16
    %v602 = vpop.permute.xlu0 %601
    %604 = vst.msk [vmem:[%s471] sm:$0xf] %vm337, %v602
    %v605 = vld [vmem:[%s408] sm:$0xf]
    %v607 = vunpack.c.l.b16 %v605
    %v608 = vpack.c.b16 %v607, %v607
    %609 = vrot.lane.b32.xlu0 %v608, 104
    %v610 = vpop.permute.xlu0 %609
    %611 = vrot.lane.b32.xlu0 %v608, 72
    %v612 = vpop.permute.xlu0 %611
    %v614 = vsel %vm148, %v610, 0
    %v617 = vsel %vm148, %v612, 0
    %619 = vmatpush.bf16.xpose.msra.mxu0 0
    %620 = vmatpush.bf16.xpose.msra.mxu0 0
    %621 = vmatpush.bf16.xpose.msra.mxu0 0
    %622 = vmatpush.bf16.xpose.msra.mxu0 0
    %623 = vmatpush.bf16.xpose.msra.mxu0 0
    %624 = vmatpush.bf16.xpose.msra.mxu0 0
    %625 = vmatpush.bf16.xpose.msra.mxu0 0
    %626 = vmatpush.bf16.xpose.msra.mxu0 %v617
    %627 = vmatmul.bf16.gmra.mxu0 %v614
    %v628 = vpop.f32.mrf.mxu0
    %v629 = vadd.f32 %v411, %v628
    %v630 = vpop.f32.mrf.mxu0
    %631 = vdwg.mxu0
    %v632 = vsel %vm148, %v629, -inf
    %633 = vmax.xlane.f32.xlu0 %v632
    %v634 = vpop.xlane.xlu0 %633
    %v635 = vsub.f32 %v629, %v634
    %v636 = vmul.f32 %v635, 1.442695
    %v637 = vpow.pop %v636
    %v638 = vsel %vm148, %v637, 0.0
    %639 = vadd.xlane.f32.xlu0 %v638
    %v640 = vpop.xlane.xlu0 %639
    %v641 = vrcp.pop %v640
    %v642 = vmul.f32 %v637, %v641
    %v643 = vpack.c.bf16 %v642, %v642
    %644 = vrot.lane.b32.xlu0 %v608, 40
    %v645 = vpop.permute.xlu0 %644
    %v647 = vsel %vm148, %v643, 0
    %v650 = vsel %vm185, %v645, 0
    %652 = vmatpush.bf16.msra.mxu0 0
    %653 = vmatpush.bf16.msra.mxu0 0
    %654 = vmatpush.bf16.msra.mxu0 0
    %655 = vmatpush.bf16.msra.mxu0 0
    %656 = vmatpush.bf16.msra.mxu0 0
    %657 = vmatpush.bf16.msra.mxu0 0
    %658 = vmatpush.bf16.msra.mxu0 0
    %659 = vmatpush.bf16.msra.mxu0 %v650
    %660 = vmatmul.bf16.gmra.mxu0 %v647
    %v661 = vpop.f32.mrf.mxu0
    %v662 = vadd.f32 0.0, %v661
    %v663 = vpop.f32.mrf.mxu0
    %664 = vdwg.mxu0
    %v665 = vpack.c.bf16 %v662, %v662
    %667 = vrot.lane.b32.xlu0 %v665, 24
    %v668 = vpop.permute.xlu0 %667
    %670 = vst.msk [vmem:[%s471] sm:$0xf] %vm404, %v668
    %v671 = vld [vmem:[#allocation3] sm:$0xf]
    %v672 = vld [vmem:[#allocation3 + $0x4] sm:$0xf]
    %v673 = vld [vmem:[#allocation10] sm:$0xf]
    %v674 = vld [vmem:[#allocation10 + $0x4] sm:$0xf]
    %v675 = vld [vmem:[#allocation10 + $0x8] sm:$0xf]
    %v676 = vld [vmem:[#allocation10 + $0xc] sm:$0xf]
    %v677 = vld [vmem:[%s5] sm:$0x1]
    %v679 = vperm.slane %v677, 0
    %v683 = vunpack.c.l.b16 %v671
    %v684 = vunpack.c.l.b16 %v672
    %v685 = vpack.c.b16 %v684, %v683
    %v690 = vunpack.c.l.b16 %v673
    %v691 = vunpack.c.l.b16 %v674
    %v692 = vunpack.c.l.b16 %v675
    %v693 = vunpack.c.l.b16 %v676
    %v694 = vpack.c.b16 %v691, %v690
    %v695 = vpack.c.b16 %v693, %v692
    %v699 = vsel %vm115, %v685, 0
    %701 = vmatpush.bf16.msra.mxu0 0
    %702 = vmatpush.bf16.msra.mxu0 0
    %703 = vmatpush.bf16.msra.mxu0 0
    %704 = vmatpush.bf16.msra.mxu0 0
    %705 = vmatpush.bf16.msra.mxu0 0
    %706 = vmatpush.bf16.msra.mxu0 0
    %707 = vmatpush.bf16.msra.mxu0 %v695
    %708 = vmatpush.bf16.msra.mxu0 %v694
    %709 = vmatmul.bf16.gmra.mxu0 %v699
    %v710 = vpop.f32.mrf.mxu0
    %v711 = vadd.f32 %v679, %v710
    %v712 = vpop.f32.mrf.mxu0
    %v713 = vadd.f32 %v679, %v712
    %714 = vdwg.mxu0
    %715 = vst.msk [vmem:[#allocation12] sm:$0xff] %vm115, %v711
    %716 = vst.msk [vmem:[#allocation12 + $0x8] sm:$0xff] %vm115, %v713
    // Predicated region
    $region42: #{tpu_custom_call.1} parent=1 // pred_check
      _
    $region43: #{tpu_custom_call.1} parent=1 // pred_check_branch
      %718 = sbr.rel (0) target = $region45
    $region44: #{tpu_custom_call.1} parent=1 // pred_region
      %720 = vsyncadd [#allocation6], 0
      %s721 = sshll.u32 [#allocation12], 4
      %s722 = int_to_ptr.vmem [resolvable:$true] %s721
      %s723 = sshll.u32 %s6, 4
      %s724 = int_to_ptr.hbm [resolvable:$true] %s723
      %729 = dma.vmem_to_hbm [thread:$0]  %s722, 256, %s724, [#allocation6], 128, 128, 8
    $region45: #{tpu_custom_call.1} parent=1 // pred_fallthru
      _
    // Predicated region
    $region46: #{tpu_custom_call.1} parent=1 // pred_check
      _
    $region47: #{tpu_custom_call.1} parent=1 // pred_check_branch
      %731 = sbr.rel (0) target = $region49
    $region48: #{tpu_custom_call.1} parent=1 // pred_region
      %733 = dma.done [#allocation6], 256
    $region49: #{tpu_custom_call.1} parent=1 // pred_fallthru
      _
    %734 = vsyncpa [#allocation5], 1
    %735 = vsyncpa [#allocation8], 1
    %736 = vsyncpa [#allocation11], 1
    %737 = vsyncpa [#allocation6], 1

</llo_original>
